<compile_context>
chip_gen: v7x
topology: tpu7x:2x2x1
jax: 0.10.0
libtpu: 0.0.40
codegen_flags: <defaults>
</compile_context>

<pallas_src>
import functools

import jax
import jax.numpy as jnp
from jax import lax
from jax.experimental import pallas as pl
from jax.experimental.pallas import tpu as pltpu

LANES = 128
MAX_BLOCK_ROWS = 8192            # (8192, 128) f32 = 4 MiB per input block
MIN_KERNEL_ELEMS = 256 * 1024    # below this a fused XLA reduce beats kernel launch
VMEM_LIMIT_BYTES = 48 * 1024 * 1024


def _l1_sum_kernel(p_ref, t_ref, o_ref, *, rows, block_rows, blocks_per_split,
                   acc_rows, has_edge):
    """Accumulate per-split partial sums of |p - t| into o_ref (acc_rows, 128)."""
    c = pl.program_id(0)   # core-split index      ("parallel")
    i = pl.program_id(1)   # row-block in split    ("arbitrary" / reduction)

    @pl.when(i == 0)
    def _init():
        o_ref[...] = jnp.zeros_like(o_ref)

    p = p_ref[...].astype(jnp.float32)
    t = t_ref[...].astype(jnp.float32)
    abs_diff = jnp.abs(p - t)

    def fold(vals):
        # block_rows/acc_rows independent add chains into acc_rows/8 vreg rows.
        o_ref[...] += jnp.sum(
            vals.reshape(block_rows // acc_rows, acc_rows, LANES), axis=0)

    if has_edge:
        # Global (unclamped) row-block index; blocks >= full_blocks may contain
        # out-of-range rows (ragged last block or split-roundup overflow block).
        bidx = c * blocks_per_split + i
        full_blocks = rows // block_rows

        @pl.when(bidx < full_blocks)
        def _full():
            fold(abs_diff)

        @pl.when(bidx >= full_blocks)
        def _edge():
            row_ids = bidx * block_rows + lax.broadcasted_iota(
                jnp.int32, (block_rows, LANES), 0)
            fold(jnp.where(row_ids < rows, abs_diff, 0.0))
    else:
        fold(abs_diff)


def pixel_loss(pred, target):
    """Mean absolute error over all elements (== nn.L1Loss() default)."""
    assert pred.shape == target.shape, (pred.shape, target.shape)
    n_elems = pred.size

    p_flat = pred.reshape(-1)
    t_flat = target.reshape(-1)

    # Fallback: tiny inputs, or element count not a multiple of 128 (avoids
    # materializing lax.slice copies of the whole input -> 1x HBM traffic).
    if n_elems < MIN_KERNEL_ELEMS or n_elems % LANES != 0:
        diff = p_flat.astype(jnp.float32) - t_flat.astype(jnp.float32)
        return jnp.mean(jnp.abs(diff)).astype(jnp.float32)

    rows = n_elems // LANES
    itemsize = jnp.dtype(pred.dtype).itemsize
    sub_mult = max(8, 32 // max(itemsize, 1))     # 8 f32, 16 bf16, 32 int8/fp8
    block_rows = min(MAX_BLOCK_ROWS, (rows // sub_mult) * sub_mult)
    num_blocks = pl.cdiv(rows, block_rows)

    # 2-TensorCore split (megacore / v7x): only when it adds no (or negligible)
    # extra work on single-TC chips.
    if num_blocks >= 16 or (num_blocks >= 2 and num_blocks % 2 == 0):
        num_splits = 2
    else:
        num_splits = 1
    blocks_per_split = pl.cdiv(num_blocks, num_splits)
    total_steps = num_splits * blocks_per_split

    acc_rows = next(r for r in (64, 32, 16, 8) if block_rows % r == 0)
    has_edge = (rows % block_rows != 0) or (total_steps != num_blocks)

    p2d = p_flat.reshape(rows, LANES)   # free bitcast reshapes, no copies
    t2d = t_flat.reshape(rows, LANES)

    if total_steps == num_blocks:
        in_map = lambda c, i: (c * blocks_per_split + i, 0)
    else:
        # Clamp overflow blocks in-bounds; their rows are masked in-kernel.
        in_map = lambda c, i: (
            jnp.minimum(c * blocks_per_split + i, num_blocks - 1), 0)

    kernel = functools.partial(
        _l1_sum_kernel, rows=rows, block_rows=block_rows,
        blocks_per_split=blocks_per_split, acc_rows=acc_rows, has_edge=has_edge)

    partials = pl.pallas_call(
        kernel,
        out_shape=jax.ShapeDtypeStruct((num_splits, acc_rows, LANES),
                                       jnp.float32),
        grid_spec=pltpu.PrefetchScalarGridSpec(
            num_scalar_prefetch=0,
            grid=(num_splits, blocks_per_split),
            in_specs=[
                pl.BlockSpec((block_rows, LANES), in_map),
                pl.BlockSpec((block_rows, LANES), in_map),
            ],
            out_specs=pl.BlockSpec((None, acc_rows, LANES),
                                   lambda c, i: (c, 0, 0)),
        ),
        compiler_params=pltpu.CompilerParams(
            dimension_semantics=("parallel", "arbitrary"),
            vmem_limit_bytes=VMEM_LIMIT_BYTES,
        ),
        cost_estimate=pl.CostEstimate(
            flops=3 * n_elems,                    # sub + abs + add per element
            transcendentals=0,
            bytes_accessed=2 * n_elems * itemsize
            + num_splits * acc_rows * LANES * 4,
        ),
    )(p2d, t2d)

    # Final cross-lane reduce + mean in the wrapper (cheap, lane-dense output).
    return (jnp.sum(partials) / jnp.float32(n_elems)).astype(jnp.float32)


if __name__ == "__main__":
    key = jax.random.PRNGKey(0)
    kp, kt = jax.random.split(key)

    # (B, C, H, W) images, large enough to take the Pallas kernel path.
    B, C, H, W = 2, 4, 192, 192
    pred = jax.random.normal(kp, (B, C, H, W), dtype=jnp.float32)
    target = jax.random.normal(kt, (B, C, H, W), dtype=jnp.float32)

    loss = pixel_loss(pred, target)
    jax.block_until_ready(loss)
    ref = jnp.mean(jnp.abs(pred - target))
    assert jnp.allclose(loss, ref, rtol=1e-5, atol=1e-6), (loss, ref)

    # Multi-block + ragged last row-block + 2-way core split (masked edge path).
    kp2, kt2 = jax.random.split(kt)
    pred2 = jax.random.normal(kp2, (2, 3, 512, 408), dtype=jnp.float32)
    target2 = jax.random.normal(kt2, (2, 3, 512, 408), dtype=jnp.float32)
    loss2 = pixel_loss(pred2, target2)
    jax.block_until_ready(loss2)
    ref2 = jnp.mean(jnp.abs(pred2 - target2))
    assert jnp.allclose(loss2, ref2, rtol=1e-5, atol=1e-6), (loss2, ref2)

    # bf16 inputs: packed sublane multiple (16) for block_rows, f32 accumulation.
    pred3 = pred.astype(jnp.bfloat16)
    target3 = target.astype(jnp.bfloat16)
    loss3 = pixel_loss(pred3, target3)
    jax.block_until_ready(loss3)
    ref3 = jnp.mean(jnp.abs(pred3.astype(jnp.float32)
                            - target3.astype(jnp.float32)))
    assert jnp.allclose(loss3, ref3, rtol=1e-4, atol=1e-5), (loss3, ref3)

    # Ragged element count -> plain-JAX fallback (no slice copies, 1x traffic).
    kp4, kt4 = jax.random.split(kt2)
    pred4 = jax.random.normal(kp4, (2, 3, 17, 19), dtype=jnp.float32)
    target4 = jax.random.normal(kt4, (2, 3, 17, 19), dtype=jnp.float32)
    loss4 = pixel_loss(pred4, target4)
    jax.block_until_ready(loss4)
    ref4 = jnp.mean(jnp.abs(pred4 - target4))
    assert jnp.allclose(loss4, ref4, rtol=1e-5, atol=1e-6), (loss4, ref4)

    print("KERNEL_OK")
</pallas_src>

<mosaic_0001>
module attributes {stable_mosaic.version = 11 : i64} {
  func.func @_l1_sum_kernel(%arg0: i32, %arg1: i32, %arg2: memref<2304x128xf32, #tpu.memory_space<vmem>>, %arg3: memref<2304x128xf32, #tpu.memory_space<vmem>>, %arg4: memref<1x64x128xf32, #tpu.memory_space<vmem>>) attributes {dimension_semantics = [#tpu.dimension_semantics<parallel>, #tpu.dimension_semantics<arbitrary>], iteration_bounds = array<i64: 1, 1>, scalar_prefetch = 0 : i64, scratch_operands = 0 : i64, tpu.core_type = #tpu.core_type<tc>, window_params = [{transform_indices = @transform_0, window_bounds = array<i64: 2304, 128>}, {transform_indices = @transform_1, window_bounds = array<i64: 2304, 128>}, {transform_indices = @transform_2, window_bounds = array<i64: 1, 64, 128>}]} {
    %c0_i32 = arith.constant 0 : i32
    %0 = arith.cmpi eq, %arg1, %c0_i32 : i32
    %1 = arith.extui %0 : i1 to i32
    %c0_i32_0 = arith.constant 0 : i32
    %2 = arith.cmpi ne, %1, %c0_i32_0 : i32
    scf.if %2 {
      %cst_10 = arith.constant 0.000000e+00 : f32
      %15 = vector.broadcast %cst_10 : f32 to vector<64x128xf32>
      %c0_11 = arith.constant 0 : index
      %c0_12 = arith.constant 0 : index
      %c0_13 = arith.constant 0 : index
      %16 = vector.load %arg4[%c0_11, %c0_12, %c0_13] : memref<1x64x128xf32, #tpu.memory_space<vmem>>, vector<1x64x128xf32>
      %17 = vector.shape_cast %16 : vector<1x64x128xf32> to vector<64x128xf32>
      %18 = vector.shape_cast %15 : vector<64x128xf32> to vector<1x64x128xf32>
      tpu.vector_store %arg4[%c0_11, %c0_12, %c0_13], %18 {strides = array<i32>} : memref<1x64x128xf32, #tpu.memory_space<vmem>>, vector<1x64x128xf32>,
    } else {
    }
    %c0 = arith.constant 0 : index
    %c0_1 = arith.constant 0 : index
    %3 = vector.load %arg2[%c0, %c0_1] : memref<2304x128xf32, #tpu.memory_space<vmem>>, vector<2304x128xf32>
    %c0_2 = arith.constant 0 : index
    %c0_3 = arith.constant 0 : index
    %4 = vector.load %arg3[%c0_2, %c0_3] : memref<2304x128xf32, #tpu.memory_space<vmem>>, vector<2304x128xf32>
    %5 = arith.subf %3, %4 : vector<2304x128xf32>
    %6 = math.absf %5 : vector<2304x128xf32>
    %c0_4 = arith.constant 0 : index
    %c0_5 = arith.constant 0 : index
    %c0_6 = arith.constant 0 : index
    %7 = vector.load %arg4[%c0_4, %c0_5, %c0_6] : memref<1x64x128xf32, #tpu.memory_space<vmem>>, vector<1x64x128xf32>
    %8 = vector.shape_cast %7 : vector<1x64x128xf32> to vector<64x128xf32>
    %9 = vector.shape_cast %6 : vector<2304x128xf32> to vector<36x64x128xf32>
    %cst = arith.constant dense<0.000000e+00> : vector<64x128xf32>
    %10 = vector.multi_reduction <add>, %9, %cst [0] : vector<36x64x128xf32> to vector<64x128xf32>
    %11 = arith.addf %8, %10 : vector<64x128xf32>
    %c0_7 = arith.constant 0 : index
    %c0_8 = arith.constant 0 : index
    %c0_9 = arith.constant 0 : index
    %12 = vector.load %arg4[%c0_7, %c0_8, %c0_9] : memref<1x64x128xf32, #tpu.memory_space<vmem>>, vector<1x64x128xf32>
    %13 = vector.shape_cast %12 : vector<1x64x128xf32> to vector<64x128xf32>
    %14 = vector.shape_cast %11 : vector<64x128xf32> to vector<1x64x128xf32>
    tpu.vector_store %arg4[%c0_7, %c0_8, %c0_9], %14 {strides = array<i32>} : memref<1x64x128xf32, #tpu.memory_space<vmem>>, vector<1x64x128xf32>,
    return
  }
  func.func @transform_0(%arg0: i32, %arg1: i32) -> (i32, i32) {
    %c1_i32 = arith.constant 1 : i32
    %0 = arith.muli %arg0, %c1_i32 : i32
    %1 = arith.addi %0, %arg1 : i32
    %c0_i32 = arith.constant 0 : i32
    %c0_i32_0 = arith.constant 0 : i32
    return %1, %c0_i32 : i32, i32
  }
  func.func @transform_1(%arg0: i32, %arg1: i32) -> (i32, i32) {
    %c1_i32 = arith.constant 1 : i32
    %0 = arith.muli %arg0, %c1_i32 : i32
    %1 = arith.addi %0, %arg1 : i32
    %c0_i32 = arith.constant 0 : i32
    %c0_i32_0 = arith.constant 0 : i32
    return %1, %c0_i32 : i32, i32
  }
  func.func @transform_2(%arg0: i32, %arg1: i32) -> (i32, i32, i32) {
    %c0_i32 = arith.constant 0 : i32
    %c0_i32_0 = arith.constant 0 : i32
    %c0_i32_1 = arith.constant 0 : i32
    return %arg0, %c0_i32, %c0_i32_0 : i32, i32, i32
  }
}

</mosaic_0001>

<llo_original>
// kernel: tpu_custom_call.1
$region0: #{tpu_custom_call.1}
  #allocation0 [shape = 'u32[]', space=smem, size = 0x4, offset = 0x4, fixed_abs, tag = 'smem constant byte address 0x4 - core index']
  #allocation1 [shape = 'u32[144,128]{1,0:T(1,128)}', space=vmem, size = 0x12000, scoped, tag = 'internal scratch']
  %s0 = inlined_call_operand.hbm [shape: f32[2304,128], index: 0, kind: input, shape index: {}]
  %s1 = inlined_call_operand.hbm [shape: f32[2304,128], index: 1, kind: input, shape index: {}]
  %s2 = inlined_call_operand.hbm [shape: f32[1,64,128], index: 2, kind: output, shape index: {}]
  %s3 = sld [smem:[#allocation0]]
  $region30: #{tpu_custom_call.1} parent=0
    _
  %s5 = ssub.s32 1, %s3
  %s6 = scalar_select 0, %s5, %s3
  $region1: #{tpu_custom_call.1} parent=0
    #allocation2 [shape = 'u8[1179648]{0}', space=vmem, size = 0x120000, scoped, tag = 'input window, operand 0, single buffered']
    #allocation3 [shape = 's32[1]{0}', space=sflag, size = 0x4, scoped, tag = 'scoped memory for tpu_custom_call.1']
    #allocation4 [shape = 's32[1]{0}', space=sflag, size = 0x4, scoped, tag = 'scoped memory for tpu_custom_call.1']
    #allocation5 [shape = 'u8[1179648]{0}', space=vmem, size = 0x120000, scoped, tag = 'input window, operand 1, single buffered']
    #allocation6 [shape = 's32[1]{0}', space=sflag, size = 0x4, scoped, tag = 'scoped memory for tpu_custom_call.1']
    #allocation7 [shape = 'u8[32768]{0}', space=vmem, size = 0x8000, scoped, tag = 'output window, operand 0, single buffered']
    %7 = vsyncpa [#allocation3], 0
    %8 = vsyncpa [#allocation6], 0
    %9 = vsyncpa [#allocation4], 0
    // Predicated region
    $region2: #{tpu_custom_call.1} parent=1 // pred_check
      _
    $region3: #{tpu_custom_call.1} parent=1 // pred_check_branch
      %11 = sbr.rel (0) target = $region5
    $region4: #{tpu_custom_call.1} parent=1 // pred_region
      %s12 = sadd.s32 0, 0
      %s13 = smul.u32 288, %s12
      %s15 = ssub.s32 36864, 36864
      %16 = vsyncadd [#allocation3], %s15
      %s17 = smul.addr %s13, 128
      %s18 = scalar_lea.hbm %s0, %s17
      %s19 = sshll.u32 [#allocation2], 4
      %s20 = int_to_ptr.vmem [resolvable:$true] %s19
      %25 = dma.hbm_to_vmem [thread:$0]  %s18, 36864, %s20, [#allocation3], 128, 128, 8
    $region5: #{tpu_custom_call.1} parent=1 // pred_fallthru
      _
    // Predicated region
    $region6: #{tpu_custom_call.1} parent=1 // pred_check
      _
    $region7: #{tpu_custom_call.1} parent=1 // pred_check_branch
      %27 = sbr.rel (0) target = $region9
    $region8: #{tpu_custom_call.1} parent=1 // pred_region
      %s28 = sadd.s32 0, 0
      %s29 = smul.u32 288, %s28
      %s31 = ssub.s32 36864, 36864
      %32 = vsyncadd [#allocation6], %s31
      %s33 = smul.addr %s29, 128
      %s34 = scalar_lea.hbm %s1, %s33
      %s35 = sshll.u32 [#allocation5], 4
      %s36 = int_to_ptr.vmem [resolvable:$true] %s35
      %41 = dma.hbm_to_vmem [thread:$0]  %s34, 36864, %s36, [#allocation6], 128, 128, 8
    $region9: #{tpu_custom_call.1} parent=1 // pred_fallthru
      _
    // Predicated region
    $region10: #{tpu_custom_call.1} parent=1 // pred_check
      _
    $region11: #{tpu_custom_call.1} parent=1 // pred_check_branch
      %43 = sbr.rel (0) target = $region13
    $region12: #{tpu_custom_call.1} parent=1 // pred_region
      %44 = dma.done [#allocation3], 36864
    $region13: #{tpu_custom_call.1} parent=1 // pred_fallthru
      _
    // Predicated region
    $region14: #{tpu_custom_call.1} parent=1 // pred_check
      _
    $region15: #{tpu_custom_call.1} parent=1 // pred_check_branch
      %46 = sbr.rel (0) target = $region17
    $region16: #{tpu_custom_call.1} parent=1 // pred_region
      %47 = dma.done [#allocation6], 36864
    $region17: #{tpu_custom_call.1} parent=1 // pred_fallthru
      _
    %s48 = sadd.s32 0, 0
    %s49 = smul.u32 288, %s48
    %s50 = sadd.s32 0, 0
    %s51 = smul.u32 288, %s50
    %p52 = scmp.eq.s32.totalorder 0, 0
    // Predicated region
    $region18: #{tpu_custom_call.1} parent=1 // pred_check
      %p53 = pneg %p52
    $region19: #{tpu_custom_call.1} parent=1 // pred_check_branch
      %55 = sbr.rel (%p53) target = $region21
    $region20: #{tpu_custom_call.1} parent=1 // pred_region
      %56 = vst [vmem:[#allocation7] sm:$0xff] 0.0
      %57 = vst [vmem:[#allocation7 + $0x8] sm:$0xff] 0.0
      %58 = vst [vmem:[#allocation7 + $0x10] sm:$0xff] 0.0
      %59 = vst [vmem:[#allocation7 + $0x18] sm:$0xff] 0.0
      %60 = vst [vmem:[#allocation7 + $0x20] sm:$0xff] 0.0
      %61 = vst [vmem:[#allocation7 + $0x28] sm:$0xff] 0.0
      %62 = vst [vmem:[#allocation7 + $0x30] sm:$0xff] 0.0
      %63 = vst [vmem:[#allocation7 + $0x38] sm:$0xff] 0.0
    $region21: #{tpu_custom_call.1} parent=1 // pred_fallthru
      _
    %v64 = vld [vmem:[#allocation2] sm:$0xff]
    %v65 = vld [vmem:[#allocation2 + $0x8] sm:$0xff]
    %v66 = vld [vmem:[#allocation2 + $0x10] sm:$0xff]
    %v67 = vld [vmem:[#allocation2 + $0x18] sm:$0xff]
    %v68 = vld [vmem:[#allocation2 + $0x20] sm:$0xff]
    %v69 = vld [vmem:[#allocation2 + $0x28] sm:$0xff]
    %v70 = vld [vmem:[#allocation2 + $0x30] sm:$0xff]
    %v71 = vld [vmem:[#allocation2 + $0x38] sm:$0xff]
    %v72 = vld [vmem:[#allocation2 + $0x40] sm:$0xff]
    %v73 = vld [vmem:[#allocation2 + $0x48] sm:$0xff]
    %v74 = vld [vmem:[#allocation2 + $0x50] sm:$0xff]
    %v75 = vld [vmem:[#allocation2 + $0x58] sm:$0xff]
    %v76 = vld [vmem:[#allocation2 + $0x60] sm:$0xff]
    %v77 = vld [vmem:[#allocation2 + $0x68] sm:$0xff]
    %v78 = vld [vmem:[#allocation2 + $0x70] sm:$0xff]
    %v79 = vld [vmem:[#allocation2 + $0x78] sm:$0xff]
    %v80 = vld [vmem:[#allocation2 + $0x80] sm:$0xff]
    %v81 = vld [vmem:[#allocation2 + $0x88] sm:$0xff]
    %v82 = vld [vmem:[#allocation2 + $0x90] sm:$0xff]
    %v83 = vld [vmem:[#allocation2 + $0x98] sm:$0xff]
    %v84 = vld [vmem:[#allocation2 + $0xa0] sm:$0xff]
    %v85 = vld [vmem:[#allocation2 + $0xa8] sm:$0xff]
    %v86 = vld [vmem:[#allocation2 + $0xb0] sm:$0xff]
    %v87 = vld [vmem:[#allocation2 + $0xb8] sm:$0xff]
    %v88 = vld [vmem:[#allocation2 + $0xc0] sm:$0xff]
    %v89 = vld [vmem:[#allocation2 + $0xc8] sm:$0xff]
    %v90 = vld [vmem:[#allocation2 + $0xd0] sm:$0xff]
    %v91 = vld [vmem:[#allocation2 + $0xd8] sm:$0xff]
    %v92 = vld [vmem:[#allocation2 + $0xe0] sm:$0xff]
    %v93 = vld [vmem:[#allocation2 + $0xe8] sm:$0xff]
    %v94 = vld [vmem:[#allocation2 + $0xf0] sm:$0xff]
    %v95 = vld [vmem:[#allocation2 + $0xf8] sm:$0xff]
    %v96 = vld [vmem:[#allocation2 + $0x100] sm:$0xff]
    %v97 = vld [vmem:[#allocation2 + $0x108] sm:$0xff]
    %v98 = vld [vmem:[#allocation2 + $0x110] sm:$0xff]
    %v99 = vld [vmem:[#allocation2 + $0x118] sm:$0xff]
    %v100 = vld [vmem:[#allocation2 + $0x120] sm:$0xff]
    %v101 = vld [vmem:[#allocation2 + $0x128] sm:$0xff]
    %v102 = vld [vmem:[#allocation2 + $0x130] sm:$0xff]
    %v103 = vld [vmem:[#allocation2 + $0x138] sm:$0xff]
    %v104 = vld [vmem:[#allocation2 + $0x140] sm:$0xff]
    %v105 = vld [vmem:[#allocation2 + $0x148] sm:$0xff]
    %v106 = vld [vmem:[#allocation2 + $0x150] sm:$0xff]
    %v107 = vld [vmem:[#allocation2 + $0x158] sm:$0xff]
    %v108 = vld [vmem:[#allocation2 + $0x160] sm:$0xff]
    %v109 = vld [vmem:[#allocation2 + $0x168] sm:$0xff]
    %v110 = vld [vmem:[#allocation2 + $0x170] sm:$0xff]
    %v111 = vld [vmem:[#allocation2 + $0x178] sm:$0xff]
    %v112 = vld [vmem:[#allocation2 + $0x180] sm:$0xff]
    %v113 = vld [vmem:[#allocation2 + $0x188] sm:$0xff]
    %v114 = vld [vmem:[#allocation2 + $0x190] sm:$0xff]
    %v115 = vld [vmem:[#allocation2 + $0x198] sm:$0xff]
    %v116 = vld [vmem:[#allocation2 + $0x1a0] sm:$0xff]
    %v117 = vld [vmem:[#allocation2 + $0x1a8] sm:$0xff]
    %v118 = vld [vmem:[#allocation2 + $0x1b0] sm:$0xff]
    %v119 = vld [vmem:[#allocation2 + $0x1b8] sm:$0xff]
    %v120 = vld [vmem:[#allocation2 + $0x1c0] sm:$0xff]
    %v121 = vld [vmem:[#allocation2 + $0x1c8] sm:$0xff]
    %v122 = vld [vmem:[#allocation2 + $0x1d0] sm:$0xff]
    %v123 = vld [vmem:[#allocation2 + $0x1d8] sm:$0xff]
    %v124 = vld [vmem:[#allocation2 + $0x1e0] sm:$0xff]
    %v125 = vld [vmem:[#allocation2 + $0x1e8] sm:$0xff]
    %v126 = vld [vmem:[#allocation2 + $0x1f0] sm:$0xff]
    %v127 = vld [vmem:[#allocation2 + $0x1f8] sm:$0xff]
    %v128 = vld [vmem:[#allocation2 + $0x200] sm:$0xff]
    %v129 = vld [vmem:[#allocation2 + $0x208] sm:$0xff]
    %v130 = vld [vmem:[#allocation2 + $0x210] sm:$0xff]
    %v131 = vld [vmem:[#allocation2 + $0x218] sm:$0xff]
    %v132 = vld [vmem:[#allocation2 + $0x220] sm:$0xff]
    %v133 = vld [vmem:[#allocation2 + $0x228] sm:$0xff]
    %v134 = vld [vmem:[#allocation2 + $0x230] sm:$0xff]
    %v135 = vld [vmem:[#allocation2 + $0x238] sm:$0xff]
    %v136 = vld [vmem:[#allocation2 + $0x240] sm:$0xff]
    %v137 = vld [vmem:[#allocation2 + $0x248] sm:$0xff]
    %v138 = vld [vmem:[#allocation2 + $0x250] sm:$0xff]
    %v139 = vld [vmem:[#allocation2 + $0x258] sm:$0xff]
    %v140 = vld [vmem:[#allocation2 + $0x260] sm:$0xff]
    %v141 = vld [vmem:[#allocation2 + $0x268] sm:$0xff]
    %v142 = vld [vmem:[#allocation2 + $0x270] sm:$0xff]
    %v143 = vld [vmem:[#allocation2 + $0x278] sm:$0xff]
    %v144 = vld [vmem:[#allocation2 + $0x280] sm:$0xff]
    %v145 = vld [vmem:[#allocation2 + $0x288] sm:$0xff]
    %v146 = vld [vmem:[#allocation2 + $0x290] sm:$0xff]
    %v147 = vld [vmem:[#allocation2 + $0x298] sm:$0xff]
    %v148 = vld [vmem:[#allocation2 + $0x2a0] sm:$0xff]
    %v149 = vld [vmem:[#allocation2 + $0x2a8] sm:$0xff]
    %v150 = vld [vmem:[#allocation2 + $0x2b0] sm:$0xff]
    %v151 = vld [vmem:[#allocation2 + $0x2b8] sm:$0xff]
    %v152 = vld [vmem:[#allocation2 + $0x2c0] sm:$0xff]
    %v153 = vld [vmem:[#allocation2 + $0x2c8] sm:$0xff]
    %v154 = vld [vmem:[#allocation2 + $0x2d0] sm:$0xff]
    %v155 = vld [vmem:[#allocation2 + $0x2d8] sm:$0xff]
    %v156 = vld [vmem:[#allocation2 + $0x2e0] sm:$0xff]
    %v157 = vld [vmem:[#allocation2 + $0x2e8] sm:$0xff]
    %v158 = vld [vmem:[#allocation2 + $0x2f0] sm:$0xff]
    %v159 = vld [vmem:[#allocation2 + $0x2f8] sm:$0xff]
    %v160 = vld [vmem:[#allocation2 + $0x300] sm:$0xff]
    %v161 = vld [vmem:[#allocation2 + $0x308] sm:$0xff]
    %v162 = vld [vmem:[#allocation2 + $0x310] sm:$0xff]
    %v163 = vld [vmem:[#allocation2 + $0x318] sm:$0xff]
    %v164 = vld [vmem:[#allocation2 + $0x320] sm:$0xff]
    %v165 = vld [vmem:[#allocation2 + $0x328] sm:$0xff]
    %v166 = vld [vmem:[#allocation2 + $0x330] sm:$0xff]
    %v167 = vld [vmem:[#allocation2 + $0x338] sm:$0xff]
    %v168 = vld [vmem:[#allocation2 + $0x340] sm:$0xff]
    %v169 = vld [vmem:[#allocation2 + $0x348] sm:$0xff]
    %v170 = vld [vmem:[#allocation2 + $0x350] sm:$0xff]
    %v171 = vld [vmem:[#allocation2 + $0x358] sm:$0xff]
    %v172 = vld [vmem:[#allocation2 + $0x360] sm:$0xff]
    %v173 = vld [vmem:[#allocation2 + $0x368] sm:$0xff]
    %v174 = vld [vmem:[#allocation2 + $0x370] sm:$0xff]
    %v175 = vld [vmem:[#allocation2 + $0x378] sm:$0xff]
    %v176 = vld [vmem:[#allocation2 + $0x380] sm:$0xff]
    %v177 = vld [vmem:[#allocation2 + $0x388] sm:$0xff]
    %v178 = vld [vmem:[#allocation2 + $0x390] sm:$0xff]
    %v179 = vld [vmem:[#allocation2 + $0x398] sm:$0xff]
    %v180 = vld [vmem:[#allocation2 + $0x3a0] sm:$0xff]
    %v181 = vld [vmem:[#allocation2 + $0x3a8] sm:$0xff]
    %v182 = vld [vmem:[#allocation2 + $0x3b0] sm:$0xff]
    %v183 = vld [vmem:[#allocation2 + $0x3b8] sm:$0xff]
    %v184 = vld [vmem:[#allocation2 + $0x3c0] sm:$0xff]
    %v185 = vld [vmem:[#allocation2 + $0x3c8] sm:$0xff]
    %v186 = vld [vmem:[#allocation2 + $0x3d0] sm:$0xff]
    %v187 = vld [vmem:[#allocation2 + $0x3d8] sm:$0xff]
    %v188 = vld [vmem:[#allocation2 + $0x3e0] sm:$0xff]
    %v189 = vld [vmem:[#allocation2 + $0x3e8] sm:$0xff]
    %v190 = vld [vmem:[#allocation2 + $0x3f0] sm:$0xff]
    %v191 = vld [vmem:[#allocation2 + $0x3f8] sm:$0xff]
    %v192 = vld [vmem:[#allocation2 + $0x400] sm:$0xff]
    %v193 = vld [vmem:[#allocation2 + $0x408] sm:$0xff]
    %v194 = vld [vmem:[#allocation2 + $0x410] sm:$0xff]
    %v195 = vld [vmem:[#allocation2 + $0x418] sm:$0xff]
    %v196 = vld [vmem:[#allocation2 + $0x420] sm:$0xff]
    %v197 = vld [vmem:[#allocation2 + $0x428] sm:$0xff]
    %v198 = vld [vmem:[#allocation2 + $0x430] sm:$0xff]
    %v199 = vld [vmem:[#allocation2 + $0x438] sm:$0xff]
    %v200 = vld [vmem:[#allocation2 + $0x440] sm:$0xff]
    %v201 = vld [vmem:[#allocation2 + $0x448] sm:$0xff]
    %v202 = vld [vmem:[#allocation2 + $0x450] sm:$0xff]
    %v203 = vld [vmem:[#allocation2 + $0x458] sm:$0xff]
    %v204 = vld [vmem:[#allocation2 + $0x460] sm:$0xff]
    %v205 = vld [vmem:[#allocation2 + $0x468] sm:$0xff]
    %v206 = vld [vmem:[#allocation2 + $0x470] sm:$0xff]
    %v207 = vld [vmem:[#allocation2 + $0x478] sm:$0xff]
    %v208 = vld [vmem:[#allocation2 + $0x480] sm:$0xff]
    %v209 = vld [vmem:[#allocation2 + $0x488] sm:$0xff]
    %v210 = vld [vmem:[#allocation2 + $0x490] sm:$0xff]
    %v211 = vld [vmem:[#allocation2 + $0x498] sm:$0xff]
    %v212 = vld [vmem:[#allocation2 + $0x4a0] sm:$0xff]
    %v213 = vld [vmem:[#allocation2 + $0x4a8] sm:$0xff]
    %v214 = vld [vmem:[#allocation2 + $0x4b0] sm:$0xff]
    %v215 = vld [vmem:[#allocation2 + $0x4b8] sm:$0xff]
    %v216 = vld [vmem:[#allocation2 + $0x4c0] sm:$0xff]
    %v217 = vld [vmem:[#allocation2 + $0x4c8] sm:$0xff]
    %v218 = vld [vmem:[#allocation2 + $0x4d0] sm:$0xff]
    %v219 = vld [vmem:[#allocation2 + $0x4d8] sm:$0xff]
    %v220 = vld [vmem:[#allocation2 + $0x4e0] sm:$0xff]
    %v221 = vld [vmem:[#allocation2 + $0x4e8] sm:$0xff]
    %v222 = vld [vmem:[#allocation2 + $0x4f0] sm:$0xff]
    %v223 = vld [vmem:[#allocation2 + $0x4f8] sm:$0xff]
    %v224 = vld [vmem:[#allocation2 + $0x500] sm:$0xff]
    %v225 = vld [vmem:[#allocation2 + $0x508] sm:$0xff]
    %v226 = vld [vmem:[#allocation2 + $0x510] sm:$0xff]
    %v227 = vld [vmem:[#allocation2 + $0x518] sm:$0xff]
    %v228 = vld [vmem:[#allocation2 + $0x520] sm:$0xff]
    %v229 = vld [vmem:[#allocation2 + $0x528] sm:$0xff]
    %v230 = vld [vmem:[#allocation2 + $0x530] sm:$0xff]
    %v231 = vld [vmem:[#allocation2 + $0x538] sm:$0xff]
    %v232 = vld [vmem:[#allocation2 + $0x540] sm:$0xff]
    %v233 = vld [vmem:[#allocation2 + $0x548] sm:$0xff]
    %v234 = vld [vmem:[#allocation2 + $0x550] sm:$0xff]
    %v235 = vld [vmem:[#allocation2 + $0x558] sm:$0xff]
    %v236 = vld [vmem:[#allocation2 + $0x560] sm:$0xff]
    %v237 = vld [vmem:[#allocation2 + $0x568] sm:$0xff]
    %v238 = vld [vmem:[#allocation2 + $0x570] sm:$0xff]
    %v239 = vld [vmem:[#allocation2 + $0x578] sm:$0xff]
    %v240 = vld [vmem:[#allocation2 + $0x580] sm:$0xff]
    %v241 = vld [vmem:[#allocation2 + $0x588] sm:$0xff]
    %v242 = vld [vmem:[#allocation2 + $0x590] sm:$0xff]
    %v243 = vld [vmem:[#allocation2 + $0x598] sm:$0xff]
    %v244 = vld [vmem:[#allocation2 + $0x5a0] sm:$0xff]
    %v245 = vld [vmem:[#allocation2 + $0x5a8] sm:$0xff]
    %v246 = vld [vmem:[#allocation2 + $0x5b0] sm:$0xff]
    %v247 = vld [vmem:[#allocation2 + $0x5b8] sm:$0xff]
    %v248 = vld [vmem:[#allocation2 + $0x5c0] sm:$0xff]
    %v249 = vld [vmem:[#allocation2 + $0x5c8] sm:$0xff]
    %v250 = vld [vmem:[#allocation2 + $0x5d0] sm:$0xff]
    %v251 = vld [vmem:[#allocation2 + $0x5d8] sm:$0xff]
    %v252 = vld [vmem:[#allocation2 + $0x5e0] sm:$0xff]
    %v253 = vld [vmem:[#allocation2 + $0x5e8] sm:$0xff]
    %v254 = vld [vmem:[#allocation2 + $0x5f0] sm:$0xff]
    %v255 = vld [vmem:[#allocation2 + $0x5f8] sm:$0xff]
    %v256 = vld [vmem:[#allocation2 + $0x600] sm:$0xff]
    %v257 = vld [vmem:[#allocation2 + $0x608] sm:$0xff]
    %v258 = vld [vmem:[#allocation2 + $0x610] sm:$0xff]
    %v259 = vld [vmem:[#allocation2 + $0x618] sm:$0xff]
    %v260 = vld [vmem:[#allocation2 + $0x620] sm:$0xff]
    %v261 = vld [vmem:[#allocation2 + $0x628] sm:$0xff]
    %v262 = vld [vmem:[#allocation2 + $0x630] sm:$0xff]
    %v263 = vld [vmem:[#allocation2 + $0x638] sm:$0xff]
    %v264 = vld [vmem:[#allocation2 + $0x640] sm:$0xff]
    %v265 = vld [vmem:[#allocation2 + $0x648] sm:$0xff]
    %v266 = vld [vmem:[#allocation2 + $0x650] sm:$0xff]
    %v267 = vld [vmem:[#allocation2 + $0x658] sm:$0xff]
    %v268 = vld [vmem:[#allocation2 + $0x660] sm:$0xff]
    %v269 = vld [vmem:[#allocation2 + $0x668] sm:$0xff]
    %v270 = vld [vmem:[#allocation2 + $0x670] sm:$0xff]
    %v271 = vld [vmem:[#allocation2 + $0x678] sm:$0xff]
    %v272 = vld [vmem:[#allocation2 + $0x680] sm:$0xff]
    %v273 = vld [vmem:[#allocation2 + $0x688] sm:$0xff]
    %v274 = vld [vmem:[#allocation2 + $0x690] sm:$0xff]
    %v275 = vld [vmem:[#allocation2 + $0x698] sm:$0xff]
    %v276 = vld [vmem:[#allocation2 + $0x6a0] sm:$0xff]
    %v277 = vld [vmem:[#allocation2 + $0x6a8] sm:$0xff]
    %v278 = vld [vmem:[#allocation2 + $0x6b0] sm:$0xff]
    %v279 = vld [vmem:[#allocation2 + $0x6b8] sm:$0xff]
    %v280 = vld [vmem:[#allocation2 + $0x6c0] sm:$0xff]
    %v281 = vld [vmem:[#allocation2 + $0x6c8] sm:$0xff]
    %v282 = vld [vmem:[#allocation2 + $0x6d0] sm:$0xff]
    %v283 = vld [vmem:[#allocation2 + $0x6d8] sm:$0xff]
    %v284 = vld [vmem:[#allocation2 + $0x6e0] sm:$0xff]
    %v285 = vld [vmem:[#allocation2 + $0x6e8] sm:$0xff]
    %v286 = vld [vmem:[#allocation2 + $0x6f0] sm:$0xff]
    %v287 = vld [vmem:[#allocation2 + $0x6f8] sm:$0xff]
    %v288 = vld [vmem:[#allocation2 + $0x700] sm:$0xff]
    %v289 = vld [vmem:[#allocation2 + $0x708] sm:$0xff]
    %v290 = vld [vmem:[#allocation2 + $0x710] sm:$0xff]
    %v291 = vld [vmem:[#allocation2 + $0x718] sm:$0xff]
    %v292 = vld [vmem:[#allocation2 + $0x720] sm:$0xff]
    %v293 = vld [vmem:[#allocation2 + $0x728] sm:$0xff]
    %v294 = vld [vmem:[#allocation2 + $0x730] sm:$0xff]
    %v295 = vld [vmem:[#allocation2 + $0x738] sm:$0xff]
    %v296 = vld [vmem:[#allocation2 + $0x740] sm:$0xff]
    %v297 = vld [vmem:[#allocation2 + $0x748] sm:$0xff]
    %v298 = vld [vmem:[#allocation2 + $0x750] sm:$0xff]
    %v299 = vld [vmem:[#allocation2 + $0x758] sm:$0xff]
    %v300 = vld [vmem:[#allocation2 + $0x760] sm:$0xff]
    %v301 = vld [vmem:[#allocation2 + $0x768] sm:$0xff]
    %v302 = vld [vmem:[#allocation2 + $0x770] sm:$0xff]
    %v303 = vld [vmem:[#allocation2 + $0x778] sm:$0xff]
    %v304 = vld [vmem:[#allocation2 + $0x780] sm:$0xff]
    %v305 = vld [vmem:[#allocation2 + $0x788] sm:$0xff]
    %v306 = vld [vmem:[#allocation2 + $0x790] sm:$0xff]
    %v307 = vld [vmem:[#allocation2 + $0x798] sm:$0xff]
    %v308 = vld [vmem:[#allocation2 + $0x7a0] sm:$0xff]
    %v309 = vld [vmem:[#allocation2 + $0x7a8] sm:$0xff]
    %v310 = vld [vmem:[#allocation2 + $0x7b0] sm:$0xff]
    %v311 = vld [vmem:[#allocation2 + $0x7b8] sm:$0xff]
    %v312 = vld [vmem:[#allocation2 + $0x7c0] sm:$0xff]
    %v313 = vld [vmem:[#allocation2 + $0x7c8] sm:$0xff]
    %v314 = vld [vmem:[#allocation2 + $0x7d0] sm:$0xff]
    %v315 = vld [vmem:[#allocation2 + $0x7d8] sm:$0xff]
    %v316 = vld [vmem:[#allocation2 + $0x7e0] sm:$0xff]
    %v317 = vld [vmem:[#allocation2 + $0x7e8] sm:$0xff]
    %v318 = vld [vmem:[#allocation2 + $0x7f0] sm:$0xff]
    %v319 = vld [vmem:[#allocation2 + $0x7f8] sm:$0xff]
    %v320 = vld [vmem:[#allocation2 + $0x800] sm:$0xff]
    %v321 = vld [vmem:[#allocation2 + $0x808] sm:$0xff]
    %v322 = vld [vmem:[#allocation2 + $0x810] sm:$0xff]
    %v323 = vld [vmem:[#allocation2 + $0x818] sm:$0xff]
    %v324 = vld [vmem:[#allocation2 + $0x820] sm:$0xff]
    %v325 = vld [vmem:[#allocation2 + $0x828] sm:$0xff]
    %v326 = vld [vmem:[#allocation2 + $0x830] sm:$0xff]
    %v327 = vld [vmem:[#allocation2 + $0x838] sm:$0xff]
    %v328 = vld [vmem:[#allocation2 + $0x840] sm:$0xff]
    %v329 = vld [vmem:[#allocation2 + $0x848] sm:$0xff]
    %v330 = vld [vmem:[#allocation2 + $0x850] sm:$0xff]
    %v331 = vld [vmem:[#allocation2 + $0x858] sm:$0xff]
    %v332 = vld [vmem:[#allocation2 + $0x860] sm:$0xff]
    %v333 = vld [vmem:[#allocation2 + $0x868] sm:$0xff]
    %v334 = vld [vmem:[#allocation2 + $0x870] sm:$0xff]
    %v335 = vld [vmem:[#allocation2 + $0x878] sm:$0xff]
    %v336 = vld [vmem:[#allocation2 + $0x880] sm:$0xff]
    %v337 = vld [vmem:[#allocation2 + $0x888] sm:$0xff]
    %v338 = vld [vmem:[#allocation2 + $0x890] sm:$0xff]
    %v339 = vld [vmem:[#allocation2 + $0x898] sm:$0xff]
    %v340 = vld [vmem:[#allocation2 + $0x8a0] sm:$0xff]
    %v341 = vld [vmem:[#allocation2 + $0x8a8] sm:$0xff]
    %v342 = vld [vmem:[#allocation2 + $0x8b0] sm:$0xff]
    %v343 = vld [vmem:[#allocation2 + $0x8b8] sm:$0xff]
    %v344 = vld [vmem:[#allocation2 + $0x8c0] sm:$0xff]
    %v345 = vld [vmem:[#allocation2 + $0x8c8] sm:$0xff]
    %v346 = vld [vmem:[#allocation2 + $0x8d0] sm:$0xff]
    %v347 = vld [vmem:[#allocation2 + $0x8d8] sm:$0xff]
    %v348 = vld [vmem:[#allocation2 + $0x8e0] sm:$0xff]
    %v349 = vld [vmem:[#allocation2 + $0x8e8] sm:$0xff]
    %v350 = vld [vmem:[#allocation2 + $0x8f0] sm:$0xff]
    %v351 = vld [vmem:[#allocation2 + $0x8f8] sm:$0xff]
    %v352 = vld [vmem:[#allocation5] sm:$0xff]
    %v353 = vld [vmem:[#allocation5 + $0x8] sm:$0xff]
    %v354 = vld [vmem:[#allocation5 + $0x10] sm:$0xff]
    %v355 = vld [vmem:[#allocation5 + $0x18] sm:$0xff]
    %v356 = vld [vmem:[#allocation5 + $0x20] sm:$0xff]
    %v357 = vld [vmem:[#allocation5 + $0x28] sm:$0xff]
    %v358 = vld [vmem:[#allocation5 + $0x30] sm:$0xff]
    %v359 = vld [vmem:[#allocation5 + $0x38] sm:$0xff]
    %v360 = vld [vmem:[#allocation5 + $0x40] sm:$0xff]
    %v361 = vld [vmem:[#allocation5 + $0x48] sm:$0xff]
    %v362 = vld [vmem:[#allocation5 + $0x50] sm:$0xff]
    %v363 = vld [vmem:[#allocation5 + $0x58] sm:$0xff]
    %v364 = vld [vmem:[#allocation5 + $0x60] sm:$0xff]
    %v365 = vld [vmem:[#allocation5 + $0x68] sm:$0xff]
    %v366 = vld [vmem:[#allocation5 + $0x70] sm:$0xff]
    %v367 = vld [vmem:[#allocation5 + $0x78] sm:$0xff]
    %v368 = vld [vmem:[#allocation5 + $0x80] sm:$0xff]
    %v369 = vld [vmem:[#allocation5 + $0x88] sm:$0xff]
    %v370 = vld [vmem:[#allocation5 + $0x90] sm:$0xff]
    %v371 = vld [vmem:[#allocation5 + $0x98] sm:$0xff]
    %v372 = vld [vmem:[#allocation5 + $0xa0] sm:$0xff]
    %v373 = vld [vmem:[#allocation5 + $0xa8] sm:$0xff]
    %v374 = vld [vmem:[#allocation5 + $0xb0] sm:$0xff]
    %v375 = vld [vmem:[#allocation5 + $0xb8] sm:$0xff]
    %v376 = vld [vmem:[#allocation5 + $0xc0] sm:$0xff]
    %v377 = vld [vmem:[#allocation5 + $0xc8] sm:$0xff]
    %v378 = vld [vmem:[#allocation5 + $0xd0] sm:$0xff]
    %v379 = vld [vmem:[#allocation5 + $0xd8] sm:$0xff]
    %v380 = vld [vmem:[#allocation5 + $0xe0] sm:$0xff]
    %v381 = vld [vmem:[#allocation5 + $0xe8] sm:$0xff]
    %v382 = vld [vmem:[#allocation5 + $0xf0] sm:$0xff]
    %v383 = vld [vmem:[#allocation5 + $0xf8] sm:$0xff]
    %v384 = vld [vmem:[#allocation5 + $0x100] sm:$0xff]
    %v385 = vld [vmem:[#allocation5 + $0x108] sm:$0xff]
    %v386 = vld [vmem:[#allocation5 + $0x110] sm:$0xff]
    %v387 = vld [vmem:[#allocation5 + $0x118] sm:$0xff]
    %v388 = vld [vmem:[#allocation5 + $0x120] sm:$0xff]
    %v389 = vld [vmem:[#allocation5 + $0x128] sm:$0xff]
    %v390 = vld [vmem:[#allocation5 + $0x130] sm:$0xff]
    %v391 = vld [vmem:[#allocation5 + $0x138] sm:$0xff]
    %v392 = vld [vmem:[#allocation5 + $0x140] sm:$0xff]
    %v393 = vld [vmem:[#allocation5 + $0x148] sm:$0xff]
    %v394 = vld [vmem:[#allocation5 + $0x150] sm:$0xff]
    %v395 = vld [vmem:[#allocation5 + $0x158] sm:$0xff]
    %v396 = vld [vmem:[#allocation5 + $0x160] sm:$0xff]
    %v397 = vld [vmem:[#allocation5 + $0x168] sm:$0xff]
    %v398 = vld [vmem:[#allocation5 + $0x170] sm:$0xff]
    %v399 = vld [vmem:[#allocation5 + $0x178] sm:$0xff]
    %v400 = vld [vmem:[#allocation5 + $0x180] sm:$0xff]
    %v401 = vld [vmem:[#allocation5 + $0x188] sm:$0xff]
    %v402 = vld [vmem:[#allocation5 + $0x190] sm:$0xff]
    %v403 = vld [vmem:[#allocation5 + $0x198] sm:$0xff]
    %v404 = vld [vmem:[#allocation5 + $0x1a0] sm:$0xff]
    %v405 = vld [vmem:[#allocation5 + $0x1a8] sm:$0xff]
    %v406 = vld [vmem:[#allocation5 + $0x1b0] sm:$0xff]
    %v407 = vld [vmem:[#allocation5 + $0x1b8] sm:$0xff]
    %v408 = vld [vmem:[#allocation5 + $0x1c0] sm:$0xff]
    %v409 = vld [vmem:[#allocation5 + $0x1c8] sm:$0xff]
    %v410 = vld [vmem:[#allocation5 + $0x1d0] sm:$0xff]
    %v411 = vld [vmem:[#allocation5 + $0x1d8] sm:$0xff]
    %v412 = vld [vmem:[#allocation5 + $0x1e0] sm:$0xff]
    %v413 = vld [vmem:[#allocation5 + $0x1e8] sm:$0xff]
    %v414 = vld [vmem:[#allocation5 + $0x1f0] sm:$0xff]
    %v415 = vld [vmem:[#allocation5 + $0x1f8] sm:$0xff]
    %v416 = vld [vmem:[#allocation5 + $0x200] sm:$0xff]
    %v417 = vld [vmem:[#allocation5 + $0x208] sm:$0xff]
    %v418 = vld [vmem:[#allocation5 + $0x210] sm:$0xff]
    %v419 = vld [vmem:[#allocation5 + $0x218] sm:$0xff]
    %v420 = vld [vmem:[#allocation5 + $0x220] sm:$0xff]
    %v421 = vld [vmem:[#allocation5 + $0x228] sm:$0xff]
    %v422 = vld [vmem:[#allocation5 + $0x230] sm:$0xff]
    %v423 = vld [vmem:[#allocation5 + $0x238] sm:$0xff]
    %v424 = vld [vmem:[#allocation5 + $0x240] sm:$0xff]
    %v425 = vld [vmem:[#allocation5 + $0x248] sm:$0xff]
    %v426 = vld [vmem:[#allocation5 + $0x250] sm:$0xff]
    %v427 = vld [vmem:[#allocation5 + $0x258] sm:$0xff]
    %v428 = vld [vmem:[#allocation5 + $0x260] sm:$0xff]
    %v429 = vld [vmem:[#allocation5 + $0x268] sm:$0xff]
    %v430 = vld [vmem:[#allocation5 + $0x270] sm:$0xff]
    %v431 = vld [vmem:[#allocation5 + $0x278] sm:$0xff]
    %v432 = vld [vmem:[#allocation5 + $0x280] sm:$0xff]
    %v433 = vld [vmem:[#allocation5 + $0x288] sm:$0xff]
    %v434 = vld [vmem:[#allocation5 + $0x290] sm:$0xff]
    %v435 = vld [vmem:[#allocation5 + $0x298] sm:$0xff]
    %v436 = vld [vmem:[#allocation5 + $0x2a0] sm:$0xff]
    %v437 = vld [vmem:[#allocation5 + $0x2a8] sm:$0xff]
    %v438 = vld [vmem:[#allocation5 + $0x2b0] sm:$0xff]
    %v439 = vld [vmem:[#allocation5 + $0x2b8] sm:$0xff]
    %v440 = vld [vmem:[#allocation5 + $0x2c0] sm:$0xff]
    %v441 = vld [vmem:[#allocation5 + $0x2c8] sm:$0xff]
    %v442 = vld [vmem:[#allocation5 + $0x2d0] sm:$0xff]
    %v443 = vld [vmem:[#allocation5 + $0x2d8] sm:$0xff]
    %v444 = vld [vmem:[#allocation5 + $0x2e0] sm:$0xff]
    %v445 = vld [vmem:[#allocation5 + $0x2e8] sm:$0xff]
    %v446 = vld [vmem:[#allocation5 + $0x2f0] sm:$0xff]
    %v447 = vld [vmem:[#allocation5 + $0x2f8] sm:$0xff]
    %v448 = vld [vmem:[#allocation5 + $0x300] sm:$0xff]
    %v449 = vld [vmem:[#allocation5 + $0x308] sm:$0xff]
    %v450 = vld [vmem:[#allocation5 + $0x310] sm:$0xff]
    %v451 = vld [vmem:[#allocation5 + $0x318] sm:$0xff]
    %v452 = vld [vmem:[#allocation5 + $0x320] sm:$0xff]
    %v453 = vld [vmem:[#allocation5 + $0x328] sm:$0xff]
    %v454 = vld [vmem:[#allocation5 + $0x330] sm:$0xff]
    %v455 = vld [vmem:[#allocation5 + $0x338] sm:$0xff]
    %v456 = vld [vmem:[#allocation5 + $0x340] sm:$0xff]
    %v457 = vld [vmem:[#allocation5 + $0x348] sm:$0xff]
    %v458 = vld [vmem:[#allocation5 + $0x350] sm:$0xff]
    %v459 = vld [vmem:[#allocation5 + $0x358] sm:$0xff]
    %v460 = vld [vmem:[#allocation5 + $0x360] sm:$0xff]
    %v461 = vld [vmem:[#allocation5 + $0x368] sm:$0xff]
    %v462 = vld [vmem:[#allocation5 + $0x370] sm:$0xff]
    %v463 = vld [vmem:[#allocation5 + $0x378] sm:$0xff]
    %v464 = vld [vmem:[#allocation5 + $0x380] sm:$0xff]
    %v465 = vld [vmem:[#allocation5 + $0x388] sm:$0xff]
    %v466 = vld [vmem:[#allocation5 + $0x390] sm:$0xff]
    %v467 = vld [vmem:[#allocation5 + $0x398] sm:$0xff]
    %v468 = vld [vmem:[#allocation5 + $0x3a0] sm:$0xff]
    %v469 = vld [vmem:[#allocation5 + $0x3a8] sm:$0xff]
    %v470 = vld [vmem:[#allocation5 + $0x3b0] sm:$0xff]
    %v471 = vld [vmem:[#allocation5 + $0x3b8] sm:$0xff]
    %v472 = vld [vmem:[#allocation5 + $0x3c0] sm:$0xff]
    %v473 = vld [vmem:[#allocation5 + $0x3c8] sm:$0xff]
    %v474 = vld [vmem:[#allocation5 + $0x3d0] sm:$0xff]
    %v475 = vld [vmem:[#allocation5 + $0x3d8] sm:$0xff]
    %v476 = vld [vmem:[#allocation5 + $0x3e0] sm:$0xff]
    %v477 = vld [vmem:[#allocation5 + $0x3e8] sm:$0xff]
    %v478 = vld [vmem:[#allocation5 + $0x3f0] sm:$0xff]
    %v479 = vld [vmem:[#allocation5 + $0x3f8] sm:$0xff]
    %v480 = vld [vmem:[#allocation5 + $0x400] sm:$0xff]
    %v481 = vld [vmem:[#allocation5 + $0x408] sm:$0xff]
    %v482 = vld [vmem:[#allocation5 + $0x410] sm:$0xff]
    %v483 = vld [vmem:[#allocation5 + $0x418] sm:$0xff]
    %v484 = vld [vmem:[#allocation5 + $0x420] sm:$0xff]
    %v485 = vld [vmem:[#allocation5 + $0x428] sm:$0xff]
    %v486 = vld [vmem:[#allocation5 + $0x430] sm:$0xff]
    %v487 = vld [vmem:[#allocation5 + $0x438] sm:$0xff]
    %v488 = vld [vmem:[#allocation5 + $0x440] sm:$0xff]
    %v489 = vld [vmem:[#allocation5 + $0x448] sm:$0xff]
    %v490 = vld [vmem:[#allocation5 + $0x450] sm:$0xff]
    %v491 = vld [vmem:[#allocation5 + $0x458] sm:$0xff]
    %v492 = vld [vmem:[#allocation5 + $0x460] sm:$0xff]
    %v493 = vld [vmem:[#allocation5 + $0x468] sm:$0xff]
    %v494 = vld [vmem:[#allocation5 + $0x470] sm:$0xff]
    %v495 = vld [vmem:[#allocation5 + $0x478] sm:$0xff]
    %v496 = vld [vmem:[#allocation5 + $0x480] sm:$0xff]
    %v497 = vld [vmem:[#allocation5 + $0x488] sm:$0xff]
    %v498 = vld [vmem:[#allocation5 + $0x490] sm:$0xff]
    %v499 = vld [vmem:[#allocation5 + $0x498] sm:$0xff]
    %v500 = vld [vmem:[#allocation5 + $0x4a0] sm:$0xff]
    %v501 = vld [vmem:[#allocation5 + $0x4a8] sm:$0xff]
    %v502 = vld [vmem:[#allocation5 + $0x4b0] sm:$0xff]
    %v503 = vld [vmem:[#allocation5 + $0x4b8] sm:$0xff]
    %v504 = vld [vmem:[#allocation5 + $0x4c0] sm:$0xff]
    %v505 = vld [vmem:[#allocation5 + $0x4c8] sm:$0xff]
    %v506 = vld [vmem:[#allocation5 + $0x4d0] sm:$0xff]
    %v507 = vld [vmem:[#allocation5 + $0x4d8] sm:$0xff]
    %v508 = vld [vmem:[#allocation5 + $0x4e0] sm:$0xff]
    %v509 = vld [vmem:[#allocation5 + $0x4e8] sm:$0xff]
    %v510 = vld [vmem:[#allocation5 + $0x4f0] sm:$0xff]
    %v511 = vld [vmem:[#allocation5 + $0x4f8] sm:$0xff]
    %v512 = vld [vmem:[#allocation5 + $0x500] sm:$0xff]
    %v513 = vld [vmem:[#allocation5 + $0x508] sm:$0xff]
    %v514 = vld [vmem:[#allocation5 + $0x510] sm:$0xff]
    %v515 = vld [vmem:[#allocation5 + $0x518] sm:$0xff]
    %v516 = vld [vmem:[#allocation5 + $0x520] sm:$0xff]
    %v517 = vld [vmem:[#allocation5 + $0x528] sm:$0xff]
    %v518 = vld [vmem:[#allocation5 + $0x530] sm:$0xff]
    %v519 = vld [vmem:[#allocation5 + $0x538] sm:$0xff]
    %v520 = vld [vmem:[#allocation5 + $0x540] sm:$0xff]
    %v521 = vld [vmem:[#allocation5 + $0x548] sm:$0xff]
    %v522 = vld [vmem:[#allocation5 + $0x550] sm:$0xff]
    %v523 = vld [vmem:[#allocation5 + $0x558] sm:$0xff]
    %v524 = vld [vmem:[#allocation5 + $0x560] sm:$0xff]
    %v525 = vld [vmem:[#allocation5 + $0x568] sm:$0xff]
    %v526 = vld [vmem:[#allocation5 + $0x570] sm:$0xff]
    %v527 = vld [vmem:[#allocation5 + $0x578] sm:$0xff]
    %v528 = vld [vmem:[#allocation5 + $0x580] sm:$0xff]
    %v529 = vld [vmem:[#allocation5 + $0x588] sm:$0xff]
    %v530 = vld [vmem:[#allocation5 + $0x590] sm:$0xff]
    %v531 = vld [vmem:[#allocation5 + $0x598] sm:$0xff]
    %v532 = vld [vmem:[#allocation5 + $0x5a0] sm:$0xff]
    %v533 = vld [vmem:[#allocation5 + $0x5a8] sm:$0xff]
    %v534 = vld [vmem:[#allocation5 + $0x5b0] sm:$0xff]
    %v535 = vld [vmem:[#allocation5 + $0x5b8] sm:$0xff]
    %v536 = vld [vmem:[#allocation5 + $0x5c0] sm:$0xff]
    %v537 = vld [vmem:[#allocation5 + $0x5c8] sm:$0xff]
    %v538 = vld [vmem:[#allocation5 + $0x5d0] sm:$0xff]
    %v539 = vld [vmem:[#allocation5 + $0x5d8] sm:$0xff]
    %v540 = vld [vmem:[#allocation5 + $0x5e0] sm:$0xff]
    %v541 = vld [vmem:[#allocation5 + $0x5e8] sm:$0xff]
    %v542 = vld [vmem:[#allocation5 + $0x5f0] sm:$0xff]
    %v543 = vld [vmem:[#allocation5 + $0x5f8] sm:$0xff]
    %v544 = vld [vmem:[#allocation5 + $0x600] sm:$0xff]
    %v545 = vld [vmem:[#allocation5 + $0x608] sm:$0xff]
    %v546 = vld [vmem:[#allocation5 + $0x610] sm:$0xff]
    %v547 = vld [vmem:[#allocation5 + $0x618] sm:$0xff]
    %v548 = vld [vmem:[#allocation5 + $0x620] sm:$0xff]
    %v549 = vld [vmem:[#allocation5 + $0x628] sm:$0xff]
    %v550 = vld [vmem:[#allocation5 + $0x630] sm:$0xff]
    %v551 = vld [vmem:[#allocation5 + $0x638] sm:$0xff]
    %v552 = vld [vmem:[#allocation5 + $0x640] sm:$0xff]
    %v553 = vld [vmem:[#allocation5 + $0x648] sm:$0xff]
    %v554 = vld [vmem:[#allocation5 + $0x650] sm:$0xff]
    %v555 = vld [vmem:[#allocation5 + $0x658] sm:$0xff]
    %v556 = vld [vmem:[#allocation5 + $0x660] sm:$0xff]
    %v557 = vld [vmem:[#allocation5 + $0x668] sm:$0xff]
    %v558 = vld [vmem:[#allocation5 + $0x670] sm:$0xff]
    %v559 = vld [vmem:[#allocation5 + $0x678] sm:$0xff]
    %v560 = vld [vmem:[#allocation5 + $0x680] sm:$0xff]
    %v561 = vld [vmem:[#allocation5 + $0x688] sm:$0xff]
    %v562 = vld [vmem:[#allocation5 + $0x690] sm:$0xff]
    %v563 = vld [vmem:[#allocation5 + $0x698] sm:$0xff]
    %v564 = vld [vmem:[#allocation5 + $0x6a0] sm:$0xff]
    %v565 = vld [vmem:[#allocation5 + $0x6a8] sm:$0xff]
    %v566 = vld [vmem:[#allocation5 + $0x6b0] sm:$0xff]
    %v567 = vld [vmem:[#allocation5 + $0x6b8] sm:$0xff]
    %v568 = vld [vmem:[#allocation5 + $0x6c0] sm:$0xff]
    %v569 = vld [vmem:[#allocation5 + $0x6c8] sm:$0xff]
    %v570 = vld [vmem:[#allocation5 + $0x6d0] sm:$0xff]
    %v571 = vld [vmem:[#allocation5 + $0x6d8] sm:$0xff]
    %v572 = vld [vmem:[#allocation5 + $0x6e0] sm:$0xff]
    %v573 = vld [vmem:[#allocation5 + $0x6e8] sm:$0xff]
    %v574 = vld [vmem:[#allocation5 + $0x6f0] sm:$0xff]
    %v575 = vld [vmem:[#allocation5 + $0x6f8] sm:$0xff]
    %v576 = vld [vmem:[#allocation5 + $0x700] sm:$0xff]
    %v577 = vld [vmem:[#allocation5 + $0x708] sm:$0xff]
    %v578 = vld [vmem:[#allocation5 + $0x710] sm:$0xff]
    %v579 = vld [vmem:[#allocation5 + $0x718] sm:$0xff]
    %v580 = vld [vmem:[#allocation5 + $0x720] sm:$0xff]
    %v581 = vld [vmem:[#allocation5 + $0x728] sm:$0xff]
    %v582 = vld [vmem:[#allocation5 + $0x730] sm:$0xff]
    %v583 = vld [vmem:[#allocation5 + $0x738] sm:$0xff]
    %v584 = vld [vmem:[#allocation5 + $0x740] sm:$0xff]
    %v585 = vld [vmem:[#allocation5 + $0x748] sm:$0xff]
    %v586 = vld [vmem:[#allocation5 + $0x750] sm:$0xff]
    %v587 = vld [vmem:[#allocation5 + $0x758] sm:$0xff]
    %v588 = vld [vmem:[#allocation5 + $0x760] sm:$0xff]
    %v589 = vld [vmem:[#allocation5 + $0x768] sm:$0xff]
    %v590 = vld [vmem:[#allocation5 + $0x770] sm:$0xff]
    %v591 = vld [vmem:[#allocation5 + $0x778] sm:$0xff]
    %v592 = vld [vmem:[#allocation5 + $0x780] sm:$0xff]
    %v593 = vld [vmem:[#allocation5 + $0x788] sm:$0xff]
    %v594 = vld [vmem:[#allocation5 + $0x790] sm:$0xff]
    %v595 = vld [vmem:[#allocation5 + $0x798] sm:$0xff]
    %v596 = vld [vmem:[#allocation5 + $0x7a0] sm:$0xff]
    %v597 = vld [vmem:[#allocation5 + $0x7a8] sm:$0xff]
    %v598 = vld [vmem:[#allocation5 + $0x7b0] sm:$0xff]
    %v599 = vld [vmem:[#allocation5 + $0x7b8] sm:$0xff]
    %v600 = vld [vmem:[#allocation5 + $0x7c0] sm:$0xff]
    %v601 = vld [vmem:[#allocation5 + $0x7c8] sm:$0xff]
    %v602 = vld [vmem:[#allocation5 + $0x7d0] sm:$0xff]
    %v603 = vld [vmem:[#allocation5 + $0x7d8] sm:$0xff]
    %v604 = vld [vmem:[#allocation5 + $0x7e0] sm:$0xff]
    %v605 = vld [vmem:[#allocation5 + $0x7e8] sm:$0xff]
    %v606 = vld [vmem:[#allocation5 + $0x7f0] sm:$0xff]
    %v607 = vld [vmem:[#allocation5 + $0x7f8] sm:$0xff]
    %v608 = vld [vmem:[#allocation5 + $0x800] sm:$0xff]
    %v609 = vld [vmem:[#allocation5 + $0x808] sm:$0xff]
    %v610 = vld [vmem:[#allocation5 + $0x810] sm:$0xff]
    %v611 = vld [vmem:[#allocation5 + $0x818] sm:$0xff]
    %v612 = vld [vmem:[#allocation5 + $0x820] sm:$0xff]
    %v613 = vld [vmem:[#allocation5 + $0x828] sm:$0xff]
    %v614 = vld [vmem:[#allocation5 + $0x830] sm:$0xff]
    %v615 = vld [vmem:[#allocation5 + $0x838] sm:$0xff]
    %v616 = vld [vmem:[#allocation5 + $0x840] sm:$0xff]
    %v617 = vld [vmem:[#allocation5 + $0x848] sm:$0xff]
    %v618 = vld [vmem:[#allocation5 + $0x850] sm:$0xff]
    %v619 = vld [vmem:[#allocation5 + $0x858] sm:$0xff]
    %v620 = vld [vmem:[#allocation5 + $0x860] sm:$0xff]
    %v621 = vld [vmem:[#allocation5 + $0x868] sm:$0xff]
    %v622 = vld [vmem:[#allocation5 + $0x870] sm:$0xff]
    %v623 = vld [vmem:[#allocation5 + $0x878] sm:$0xff]
    %v624 = vld [vmem:[#allocation5 + $0x880] sm:$0xff]
    %v625 = vld [vmem:[#allocation5 + $0x888] sm:$0xff]
    %v626 = vld [vmem:[#allocation5 + $0x890] sm:$0xff]
    %v627 = vld [vmem:[#allocation5 + $0x898] sm:$0xff]
    %v628 = vld [vmem:[#allocation5 + $0x8a0] sm:$0xff]
    %v629 = vld [vmem:[#allocation5 + $0x8a8] sm:$0xff]
    %v630 = vld [vmem:[#allocation5 + $0x8b0] sm:$0xff]
    %v631 = vld [vmem:[#allocation5 + $0x8b8] sm:$0xff]
    %v632 = vld [vmem:[#allocation5 + $0x8c0] sm:$0xff]
    %v633 = vld [vmem:[#allocation5 + $0x8c8] sm:$0xff]
    %v634 = vld [vmem:[#allocation5 + $0x8d0] sm:$0xff]
    %v635 = vld [vmem:[#allocation5 + $0x8d8] sm:$0xff]
    %v636 = vld [vmem:[#allocation5 + $0x8e0] sm:$0xff]
    %v637 = vld [vmem:[#allocation5 + $0x8e8] sm:$0xff]
    %v638 = vld [vmem:[#allocation5 + $0x8f0] sm:$0xff]
    %v639 = vld [vmem:[#allocation5 + $0x8f8] sm:$0xff]
    %v640 = vsub.f32 %v64, %v352
    %v641 = vsub.f32 %v65, %v353
    %v642 = vsub.f32 %v66, %v354
    %v643 = vsub.f32 %v67, %v355
    %v644 = vsub.f32 %v68, %v356
    %v645 = vsub.f32 %v69, %v357
    %v646 = vsub.f32 %v70, %v358
    %v647 = vsub.f32 %v71, %v359
    %v648 = vsub.f32 %v72, %v360
    %v649 = vsub.f32 %v73, %v361
    %v650 = vsub.f32 %v74, %v362
    %v651 = vsub.f32 %v75, %v363
    %v652 = vsub.f32 %v76, %v364
    %v653 = vsub.f32 %v77, %v365
    %v654 = vsub.f32 %v78, %v366
    %v655 = vsub.f32 %v79, %v367
    %v656 = vsub.f32 %v80, %v368
    %v657 = vsub.f32 %v81, %v369
    %v658 = vsub.f32 %v82, %v370
    %v659 = vsub.f32 %v83, %v371
    %v660 = vsub.f32 %v84, %v372
    %v661 = vsub.f32 %v85, %v373
    %v662 = vsub.f32 %v86, %v374
    %v663 = vsub.f32 %v87, %v375
    %v664 = vsub.f32 %v88, %v376
    %v665 = vsub.f32 %v89, %v377
    %v666 = vsub.f32 %v90, %v378
    %v667 = vsub.f32 %v91, %v379
    %v668 = vsub.f32 %v92, %v380
    %v669 = vsub.f32 %v93, %v381
    %v670 = vsub.f32 %v94, %v382
    %v671 = vsub.f32 %v95, %v383
    %v672 = vsub.f32 %v96, %v384
    %v673 = vsub.f32 %v97, %v385
    %v674 = vsub.f32 %v98, %v386
    %v675 = vsub.f32 %v99, %v387
    %v676 = vsub.f32 %v100, %v388
    %v677 = vsub.f32 %v101, %v389
    %v678 = vsub.f32 %v102, %v390
    %v679 = vsub.f32 %v103, %v391
    %v680 = vsub.f32 %v104, %v392
    %v681 = vsub.f32 %v105, %v393
    %v682 = vsub.f32 %v106, %v394
    %v683 = vsub.f32 %v107, %v395
    %v684 = vsub.f32 %v108, %v396
    %v685 = vsub.f32 %v109, %v397
    %v686 = vsub.f32 %v110, %v398
    %v687 = vsub.f32 %v111, %v399
    %v688 = vsub.f32 %v112, %v400
    %v689 = vsub.f32 %v113, %v401
    %v690 = vsub.f32 %v114, %v402
    %v691 = vsub.f32 %v115, %v403
    %v692 = vsub.f32 %v116, %v404
    %v693 = vsub.f32 %v117, %v405
    %v694 = vsub.f32 %v118, %v406
    %v695 = vsub.f32 %v119, %v407
    %v696 = vsub.f32 %v120, %v408
    %v697 = vsub.f32 %v121, %v409
    %v698 = vsub.f32 %v122, %v410
    %v699 = vsub.f32 %v123, %v411
    %v700 = vsub.f32 %v124, %v412
    %v701 = vsub.f32 %v125, %v413
    %v702 = vsub.f32 %v126, %v414
    %v703 = vsub.f32 %v127, %v415
    %v704 = vsub.f32 %v128, %v416
    %v705 = vsub.f32 %v129, %v417
    %v706 = vsub.f32 %v130, %v418
    %v707 = vsub.f32 %v131, %v419
    %v708 = vsub.f32 %v132, %v420
    %v709 = vsub.f32 %v133, %v421
    %v710 = vsub.f32 %v134, %v422
    %v711 = vsub.f32 %v135, %v423
    %v712 = vsub.f32 %v136, %v424
    %v713 = vsub.f32 %v137, %v425
    %v714 = vsub.f32 %v138, %v426
    %v715 = vsub.f32 %v139, %v427
    %v716 = vsub.f32 %v140, %v428
    %v717 = vsub.f32 %v141, %v429
    %v718 = vsub.f32 %v142, %v430
    %v719 = vsub.f32 %v143, %v431
    %v720 = vsub.f32 %v144, %v432
    %v721 = vsub.f32 %v145, %v433
    %v722 = vsub.f32 %v146, %v434
    %v723 = vsub.f32 %v147, %v435
    %v724 = vsub.f32 %v148, %v436
    %v725 = vsub.f32 %v149, %v437
    %v726 = vsub.f32 %v150, %v438
    %v727 = vsub.f32 %v151, %v439
    %v728 = vsub.f32 %v152, %v440
    %v729 = vsub.f32 %v153, %v441
    %v730 = vsub.f32 %v154, %v442
    %v731 = vsub.f32 %v155, %v443
    %v732 = vsub.f32 %v156, %v444
    %v733 = vsub.f32 %v157, %v445
    %v734 = vsub.f32 %v158, %v446
    %v735 = vsub.f32 %v159, %v447
    %v736 = vsub.f32 %v160, %v448
    %v737 = vsub.f32 %v161, %v449
    %v738 = vsub.f32 %v162, %v450
    %v739 = vsub.f32 %v163, %v451
    %v740 = vsub.f32 %v164, %v452
    %v741 = vsub.f32 %v165, %v453
    %v742 = vsub.f32 %v166, %v454
    %v743 = vsub.f32 %v167, %v455
    %v744 = vsub.f32 %v168, %v456
    %v745 = vsub.f32 %v169, %v457
    %v746 = vsub.f32 %v170, %v458
    %v747 = vsub.f32 %v171, %v459
    %v748 = vsub.f32 %v172, %v460
    %v749 = vsub.f32 %v173, %v461
    %v750 = vsub.f32 %v174, %v462
    %v751 = vsub.f32 %v175, %v463
    %v752 = vsub.f32 %v176, %v464
    %v753 = vsub.f32 %v177, %v465
    %v754 = vsub.f32 %v178, %v466
    %v755 = vsub.f32 %v179, %v467
    %v756 = vsub.f32 %v180, %v468
    %v757 = vsub.f32 %v181, %v469
    %v758 = vsub.f32 %v182, %v470
    %v759 = vsub.f32 %v183, %v471
    %v760 = vsub.f32 %v184, %v472
    %v761 = vsub.f32 %v185, %v473
    %v762 = vsub.f32 %v186, %v474
    %v763 = vsub.f32 %v187, %v475
    %v764 = vsub.f32 %v188, %v476
    %v765 = vsub.f32 %v189, %v477
    %v766 = vsub.f32 %v190, %v478
    %v767 = vsub.f32 %v191, %v479
    %v768 = vsub.f32 %v192, %v480
    %v769 = vsub.f32 %v193, %v481
    %v770 = vsub.f32 %v194, %v482
    %v771 = vsub.f32 %v195, %v483
    %v772 = vsub.f32 %v196, %v484
    %v773 = vsub.f32 %v197, %v485
    %v774 = vsub.f32 %v198, %v486
    %v775 = vsub.f32 %v199, %v487
    %v776 = vsub.f32 %v200, %v488
    %v777 = vsub.f32 %v201, %v489
    %v778 = vsub.f32 %v202, %v490
    %v779 = vsub.f32 %v203, %v491
    %v780 = vsub.f32 %v204, %v492
    %v781 = vsub.f32 %v205, %v493
    %v782 = vsub.f32 %v206, %v494
    %v783 = vsub.f32 %v207, %v495
    %v784 = vsub.f32 %v208, %v496
    %v785 = vsub.f32 %v209, %v497
    %v786 = vsub.f32 %v210, %v498
    %v787 = vsub.f32 %v211, %v499
    %v788 = vsub.f32 %v212, %v500
    %v789 = vsub.f32 %v213, %v501
    %v790 = vsub.f32 %v214, %v502
    %v791 = vsub.f32 %v215, %v503
    %v792 = vsub.f32 %v216, %v504
    %v793 = vsub.f32 %v217, %v505
    %v794 = vsub.f32 %v218, %v506
    %v795 = vsub.f32 %v219, %v507
    %v796 = vsub.f32 %v220, %v508
    %v797 = vsub.f32 %v221, %v509
    %v798 = vsub.f32 %v222, %v510
    %v799 = vsub.f32 %v223, %v511
    %v800 = vsub.f32 %v224, %v512
    %v801 = vsub.f32 %v225, %v513
    %v802 = vsub.f32 %v226, %v514
    %v803 = vsub.f32 %v227, %v515
    %v804 = vsub.f32 %v228, %v516
    %v805 = vsub.f32 %v229, %v517
    %v806 = vsub.f32 %v230, %v518
    %v807 = vsub.f32 %v231, %v519
    %v808 = vsub.f32 %v232, %v520
    %v809 = vsub.f32 %v233, %v521
    %v810 = vsub.f32 %v234, %v522
    %v811 = vsub.f32 %v235, %v523
    %v812 = vsub.f32 %v236, %v524
    %v813 = vsub.f32 %v237, %v525
    %v814 = vsub.f32 %v238, %v526
    %v815 = vsub.f32 %v239, %v527
    %v816 = vsub.f32 %v240, %v528
    %v817 = vsub.f32 %v241, %v529
    %v818 = vsub.f32 %v242, %v530
    %v819 = vsub.f32 %v243, %v531
    %v820 = vsub.f32 %v244, %v532
    %v821 = vsub.f32 %v245, %v533
    %v822 = vsub.f32 %v246, %v534
    %v823 = vsub.f32 %v247, %v535
    %v824 = vsub.f32 %v248, %v536
    %v825 = vsub.f32 %v249, %v537
    %v826 = vsub.f32 %v250, %v538
    %v827 = vsub.f32 %v251, %v539
    %v828 = vsub.f32 %v252, %v540
    %v829 = vsub.f32 %v253, %v541
    %v830 = vsub.f32 %v254, %v542
    %v831 = vsub.f32 %v255, %v543
    %v832 = vsub.f32 %v256, %v544
    %v833 = vsub.f32 %v257, %v545
    %v834 = vsub.f32 %v258, %v546
    %v835 = vsub.f32 %v259, %v547
    %v836 = vsub.f32 %v260, %v548
    %v837 = vsub.f32 %v261, %v549
    %v838 = vsub.f32 %v262, %v550
    %v839 = vsub.f32 %v263, %v551
    %v840 = vsub.f32 %v264, %v552
    %v841 = vsub.f32 %v265, %v553
    %v842 = vsub.f32 %v266, %v554
    %v843 = vsub.f32 %v267, %v555
    %v844 = vsub.f32 %v268, %v556
    %v845 = vsub.f32 %v269, %v557
    %v846 = vsub.f32 %v270, %v558
    %v847 = vsub.f32 %v271, %v559
    %v848 = vsub.f32 %v272, %v560
    %v849 = vsub.f32 %v273, %v561
    %v850 = vsub.f32 %v274, %v562
    %v851 = vsub.f32 %v275, %v563
    %v852 = vsub.f32 %v276, %v564
    %v853 = vsub.f32 %v277, %v565
    %v854 = vsub.f32 %v278, %v566
    %v855 = vsub.f32 %v279, %v567
    %v856 = vsub.f32 %v280, %v568
    %v857 = vsub.f32 %v281, %v569
    %v858 = vsub.f32 %v282, %v570
    %v859 = vsub.f32 %v283, %v571
    %v860 = vsub.f32 %v284, %v572
    %v861 = vsub.f32 %v285, %v573
    %v862 = vsub.f32 %v286, %v574
    %v863 = vsub.f32 %v287, %v575
    %v864 = vsub.f32 %v288, %v576
    %v865 = vsub.f32 %v289, %v577
    %v866 = vsub.f32 %v290, %v578
    %v867 = vsub.f32 %v291, %v579
    %v868 = vsub.f32 %v292, %v580
    %v869 = vsub.f32 %v293, %v581
    %v870 = vsub.f32 %v294, %v582
    %v871 = vsub.f32 %v295, %v583
    %v872 = vsub.f32 %v296, %v584
    %v873 = vsub.f32 %v297, %v585
    %v874 = vsub.f32 %v298, %v586
    %v875 = vsub.f32 %v299, %v587
    %v876 = vsub.f32 %v300, %v588
    %v877 = vsub.f32 %v301, %v589
    %v878 = vsub.f32 %v302, %v590
    %v879 = vsub.f32 %v303, %v591
    %v880 = vsub.f32 %v304, %v592
    %v881 = vsub.f32 %v305, %v593
    %v882 = vsub.f32 %v306, %v594
    %v883 = vsub.f32 %v307, %v595
    %v884 = vsub.f32 %v308, %v596
    %v885 = vsub.f32 %v309, %v597
    %v886 = vsub.f32 %v310, %v598
    %v887 = vsub.f32 %v311, %v599
    %v888 = vsub.f32 %v312, %v600
    %v889 = vsub.f32 %v313, %v601
    %v890 = vsub.f32 %v314, %v602
    %v891 = vsub.f32 %v315, %v603
    %v892 = vsub.f32 %v316, %v604
    %v893 = vsub.f32 %v317, %v605
    %v894 = vsub.f32 %v318, %v606
    %v895 = vsub.f32 %v319, %v607
    %v896 = vsub.f32 %v320, %v608
    %v897 = vsub.f32 %v321, %v609
    %v898 = vsub.f32 %v322, %v610
    %v899 = vsub.f32 %v323, %v611
    %v900 = vsub.f32 %v324, %v612
    %v901 = vsub.f32 %v325, %v613
    %v902 = vsub.f32 %v326, %v614
    %v903 = vsub.f32 %v327, %v615
    %v904 = vsub.f32 %v328, %v616
    %v905 = vsub.f32 %v329, %v617
    %v906 = vsub.f32 %v330, %v618
    %v907 = vsub.f32 %v331, %v619
    %v908 = vsub.f32 %v332, %v620
    %v909 = vsub.f32 %v333, %v621
    %v910 = vsub.f32 %v334, %v622
    %v911 = vsub.f32 %v335, %v623
    %v912 = vsub.f32 %v336, %v624
    %v913 = vsub.f32 %v337, %v625
    %v914 = vsub.f32 %v338, %v626
    %v915 = vsub.f32 %v339, %v627
    %v916 = vsub.f32 %v340, %v628
    %v917 = vsub.f32 %v341, %v629
    %v918 = vsub.f32 %v342, %v630
    %v919 = vsub.f32 %v343, %v631
    %v920 = vsub.f32 %v344, %v632
    %v921 = vsub.f32 %v345, %v633
    %v922 = vsub.f32 %v346, %v634
    %v923 = vsub.f32 %v347, %v635
    %v924 = vsub.f32 %v348, %v636
    %v925 = vsub.f32 %v349, %v637
    %v926 = vsub.f32 %v350, %v638
    %v927 = vsub.f32 %v351, %v639
    %v928 = vand.u32 2147483647, %v640
    %v929 = vand.u32 2147483647, %v641
    %v930 = vand.u32 2147483647, %v642
    %v931 = vand.u32 2147483647, %v643
    %v932 = vand.u32 2147483647, %v644
    %v933 = vand.u32 2147483647, %v645
    %v934 = vand.u32 2147483647, %v646
    %v935 = vand.u32 2147483647, %v647
    %v936 = vand.u32 2147483647, %v648
    %v937 = vand.u32 2147483647, %v649
    %v938 = vand.u32 2147483647, %v650
    %v939 = vand.u32 2147483647, %v651
    %v940 = vand.u32 2147483647, %v652
    %v941 = vand.u32 2147483647, %v653
    %v942 = vand.u32 2147483647, %v654
    %v943 = vand.u32 2147483647, %v655
    %v944 = vand.u32 2147483647, %v656
    %v945 = vand.u32 2147483647, %v657
    %v946 = vand.u32 2147483647, %v658
    %v947 = vand.u32 2147483647, %v659
    %v948 = vand.u32 2147483647, %v660
    %v949 = vand.u32 2147483647, %v661
    %v950 = vand.u32 2147483647, %v662
    %v951 = vand.u32 2147483647, %v663
    %v952 = vand.u32 2147483647, %v664
    %v953 = vand.u32 2147483647, %v665
    %v954 = vand.u32 2147483647, %v666
    %v955 = vand.u32 2147483647, %v667
    %v956 = vand.u32 2147483647, %v668
    %v957 = vand.u32 2147483647, %v669
    %v958 = vand.u32 2147483647, %v670
    %v959 = vand.u32 2147483647, %v671
    %v960 = vand.u32 2147483647, %v672
    %v961 = vand.u32 2147483647, %v673
    %v962 = vand.u32 2147483647, %v674
    %v963 = vand.u32 2147483647, %v675
    %v964 = vand.u32 2147483647, %v676
    %v965 = vand.u32 2147483647, %v677
    %v966 = vand.u32 2147483647, %v678
    %v967 = vand.u32 2147483647, %v679
    %v968 = vand.u32 2147483647, %v680
    %v969 = vand.u32 2147483647, %v681
    %v970 = vand.u32 2147483647, %v682
    %v971 = vand.u32 2147483647, %v683
    %v972 = vand.u32 2147483647, %v684
    %v973 = vand.u32 2147483647, %v685
    %v974 = vand.u32 2147483647, %v686
    %v975 = vand.u32 2147483647, %v687
    %v976 = vand.u32 2147483647, %v688
    %v977 = vand.u32 2147483647, %v689
    %v978 = vand.u32 2147483647, %v690
    %v979 = vand.u32 2147483647, %v691
    %v980 = vand.u32 2147483647, %v692
    %v981 = vand.u32 2147483647, %v693
    %v982 = vand.u32 2147483647, %v694
    %v983 = vand.u32 2147483647, %v695
    %v984 = vand.u32 2147483647, %v696
    %v985 = vand.u32 2147483647, %v697
    %v986 = vand.u32 2147483647, %v698
    %v987 = vand.u32 2147483647, %v699
    %v988 = vand.u32 2147483647, %v700
    %v989 = vand.u32 2147483647, %v701
    %v990 = vand.u32 2147483647, %v702
    %v991 = vand.u32 2147483647, %v703
    %v992 = vand.u32 2147483647, %v704
    %v993 = vand.u32 2147483647, %v705
    %v994 = vand.u32 2147483647, %v706
    %v995 = vand.u32 2147483647, %v707
    %v996 = vand.u32 2147483647, %v708
    %v997 = vand.u32 2147483647, %v709
    %v998 = vand.u32 2147483647, %v710
    %v999 = vand.u32 2147483647, %v711
    %v1000 = vand.u32 2147483647, %v712
    %v1001 = vand.u32 2147483647, %v713
    %v1002 = vand.u32 2147483647, %v714
    %v1003 = vand.u32 2147483647, %v715
    %v1004 = vand.u32 2147483647, %v716
    %v1005 = vand.u32 2147483647, %v717
    %v1006 = vand.u32 2147483647, %v718
    %v1007 = vand.u32 2147483647, %v719
    %v1008 = vand.u32 2147483647, %v720
    %v1009 = vand.u32 2147483647, %v721
    %v1010 = vand.u32 2147483647, %v722
    %v1011 = vand.u32 2147483647, %v723
    %v1012 = vand.u32 2147483647, %v724
    %v1013 = vand.u32 2147483647, %v725
    %v1014 = vand.u32 2147483647, %v726
    %v1015 = vand.u32 2147483647, %v727
    %v1016 = vand.u32 2147483647, %v728
    %v1017 = vand.u32 2147483647, %v729
    %v1018 = vand.u32 2147483647, %v730
    %v1019 = vand.u32 2147483647, %v731
    %v1020 = vand.u32 2147483647, %v732
    %v1021 = vand.u32 2147483647, %v733
    %v1022 = vand.u32 2147483647, %v734
    %v1023 = vand.u32 2147483647, %v735
    %v1024 = vand.u32 2147483647, %v736
    %v1025 = vand.u32 2147483647, %v737
    %v1026 = vand.u32 2147483647, %v738
    %v1027 = vand.u32 2147483647, %v739
    %v1028 = vand.u32 2147483647, %v740
    %v1029 = vand.u32 2147483647, %v741
    %v1030 = vand.u32 2147483647, %v742
    %v1031 = vand.u32 2147483647, %v743
    %v1032 = vand.u32 2147483647, %v744
    %v1033 = vand.u32 2147483647, %v745
    %v1034 = vand.u32 2147483647, %v746
    %v1035 = vand.u32 2147483647, %v747
    %v1036 = vand.u32 2147483647, %v748
    %v1037 = vand.u32 2147483647, %v749
    %v1038 = vand.u32 2147483647, %v750
    %v1039 = vand.u32 2147483647, %v751
    %v1040 = vand.u32 2147483647, %v752
    %v1041 = vand.u32 2147483647, %v753
    %v1042 = vand.u32 2147483647, %v754
    %v1043 = vand.u32 2147483647, %v755
    %v1044 = vand.u32 2147483647, %v756
    %v1045 = vand.u32 2147483647, %v757
    %v1046 = vand.u32 2147483647, %v758
    %v1047 = vand.u32 2147483647, %v759
    %v1048 = vand.u32 2147483647, %v760
    %v1049 = vand.u32 2147483647, %v761
    %v1050 = vand.u32 2147483647, %v762
    %v1051 = vand.u32 2147483647, %v763
    %v1052 = vand.u32 2147483647, %v764
    %v1053 = vand.u32 2147483647, %v765
    %v1054 = vand.u32 2147483647, %v766
    %v1055 = vand.u32 2147483647, %v767
    %v1056 = vand.u32 2147483647, %v768
    %v1057 = vand.u32 2147483647, %v769
    %v1058 = vand.u32 2147483647, %v770
    %v1059 = vand.u32 2147483647, %v771
    %v1060 = vand.u32 2147483647, %v772
    %v1061 = vand.u32 2147483647, %v773
    %v1062 = vand.u32 2147483647, %v774
    %v1063 = vand.u32 2147483647, %v775
    %v1064 = vand.u32 2147483647, %v776
    %v1065 = vand.u32 2147483647, %v777
    %v1066 = vand.u32 2147483647, %v778
    %v1067 = vand.u32 2147483647, %v779
    %v1068 = vand.u32 2147483647, %v780
    %v1069 = vand.u32 2147483647, %v781
    %v1070 = vand.u32 2147483647, %v782
    %v1071 = vand.u32 2147483647, %v783
    %v1072 = vand.u32 2147483647, %v784
    %v1073 = vand.u32 2147483647, %v785
    %v1074 = vand.u32 2147483647, %v786
    %v1075 = vand.u32 2147483647, %v787
    %v1076 = vand.u32 2147483647, %v788
    %v1077 = vand.u32 2147483647, %v789
    %v1078 = vand.u32 2147483647, %v790
    %v1079 = vand.u32 2147483647, %v791
    %v1080 = vand.u32 2147483647, %v792
    %v1081 = vand.u32 2147483647, %v793
    %v1082 = vand.u32 2147483647, %v794
    %v1083 = vand.u32 2147483647, %v795
    %v1084 = vand.u32 2147483647, %v796
    %v1085 = vand.u32 2147483647, %v797
    %v1086 = vand.u32 2147483647, %v798
    %v1087 = vand.u32 2147483647, %v799
    %v1088 = vand.u32 2147483647, %v800
    %v1089 = vand.u32 2147483647, %v801
    %v1090 = vand.u32 2147483647, %v802
    %v1091 = vand.u32 2147483647, %v803
    %v1092 = vand.u32 2147483647, %v804
    %v1093 = vand.u32 2147483647, %v805
    %v1094 = vand.u32 2147483647, %v806
    %v1095 = vand.u32 2147483647, %v807
    %v1096 = vand.u32 2147483647, %v808
    %v1097 = vand.u32 2147483647, %v809
    %v1098 = vand.u32 2147483647, %v810
    %v1099 = vand.u32 2147483647, %v811
    %v1100 = vand.u32 2147483647, %v812
    %v1101 = vand.u32 2147483647, %v813
    %v1102 = vand.u32 2147483647, %v814
    %v1103 = vand.u32 2147483647, %v815
    %v1104 = vand.u32 2147483647, %v816
    %v1105 = vand.u32 2147483647, %v817
    %v1106 = vand.u32 2147483647, %v818
    %v1107 = vand.u32 2147483647, %v819
    %v1108 = vand.u32 2147483647, %v820
    %v1109 = vand.u32 2147483647, %v821
    %v1110 = vand.u32 2147483647, %v822
    %v1111 = vand.u32 2147483647, %v823
    %v1112 = vand.u32 2147483647, %v824
    %v1113 = vand.u32 2147483647, %v825
    %v1114 = vand.u32 2147483647, %v826
    %v1115 = vand.u32 2147483647, %v827
    %v1116 = vand.u32 2147483647, %v828
    %v1117 = vand.u32 2147483647, %v829
    %v1118 = vand.u32 2147483647, %v830
    %v1119 = vand.u32 2147483647, %v831
    %v1120 = vand.u32 2147483647, %v832
    %v1121 = vand.u32 2147483647, %v833
    %v1122 = vand.u32 2147483647, %v834
    %v1123 = vand.u32 2147483647, %v835
    %v1124 = vand.u32 2147483647, %v836
    %v1125 = vand.u32 2147483647, %v837
    %v1126 = vand.u32 2147483647, %v838
    %v1127 = vand.u32 2147483647, %v839
    %v1128 = vand.u32 2147483647, %v840
    %v1129 = vand.u32 2147483647, %v841
    %v1130 = vand.u32 2147483647, %v842
    %v1131 = vand.u32 2147483647, %v843
    %v1132 = vand.u32 2147483647, %v844
    %v1133 = vand.u32 2147483647, %v845
    %v1134 = vand.u32 2147483647, %v846
    %v1135 = vand.u32 2147483647, %v847
    %v1136 = vand.u32 2147483647, %v848
    %v1137 = vand.u32 2147483647, %v849
    %v1138 = vand.u32 2147483647, %v850
    %v1139 = vand.u32 2147483647, %v851
    %v1140 = vand.u32 2147483647, %v852
    %v1141 = vand.u32 2147483647, %v853
    %v1142 = vand.u32 2147483647, %v854
    %v1143 = vand.u32 2147483647, %v855
    %v1144 = vand.u32 2147483647, %v856
    %v1145 = vand.u32 2147483647, %v857
    %v1146 = vand.u32 2147483647, %v858
    %v1147 = vand.u32 2147483647, %v859
    %v1148 = vand.u32 2147483647, %v860
    %v1149 = vand.u32 2147483647, %v861
    %v1150 = vand.u32 2147483647, %v862
    %v1151 = vand.u32 2147483647, %v863
    %v1152 = vand.u32 2147483647, %v864
    %v1153 = vand.u32 2147483647, %v865
    %v1154 = vand.u32 2147483647, %v866
    %v1155 = vand.u32 2147483647, %v867
    %v1156 = vand.u32 2147483647, %v868
    %v1157 = vand.u32 2147483647, %v869
    %v1158 = vand.u32 2147483647, %v870
    %v1159 = vand.u32 2147483647, %v871
    %v1160 = vand.u32 2147483647, %v872
    %v1161 = vand.u32 2147483647, %v873
    %v1162 = vand.u32 2147483647, %v874
    %v1163 = vand.u32 2147483647, %v875
    %v1164 = vand.u32 2147483647, %v876
    %v1165 = vand.u32 2147483647, %v877
    %v1166 = vand.u32 2147483647, %v878
    %v1167 = vand.u32 2147483647, %v879
    %v1168 = vand.u32 2147483647, %v880
    %v1169 = vand.u32 2147483647, %v881
    %v1170 = vand.u32 2147483647, %v882
    %v1171 = vand.u32 2147483647, %v883
    %v1172 = vand.u32 2147483647, %v884
    %v1173 = vand.u32 2147483647, %v885
    %v1174 = vand.u32 2147483647, %v886
    %v1175 = vand.u32 2147483647, %v887
    %v1176 = vand.u32 2147483647, %v888
    %v1177 = vand.u32 2147483647, %v889
    %v1178 = vand.u32 2147483647, %v890
    %v1179 = vand.u32 2147483647, %v891
    %v1180 = vand.u32 2147483647, %v892
    %v1181 = vand.u32 2147483647, %v893
    %v1182 = vand.u32 2147483647, %v894
    %v1183 = vand.u32 2147483647, %v895
    %v1184 = vand.u32 2147483647, %v896
    %v1185 = vand.u32 2147483647, %v897
    %v1186 = vand.u32 2147483647, %v898
    %v1187 = vand.u32 2147483647, %v899
    %v1188 = vand.u32 2147483647, %v900
    %v1189 = vand.u32 2147483647, %v901
    %v1190 = vand.u32 2147483647, %v902
    %v1191 = vand.u32 2147483647, %v903
    %v1192 = vand.u32 2147483647, %v904
    %v1193 = vand.u32 2147483647, %v905
    %v1194 = vand.u32 2147483647, %v906
    %v1195 = vand.u32 2147483647, %v907
    %v1196 = vand.u32 2147483647, %v908
    %v1197 = vand.u32 2147483647, %v909
    %v1198 = vand.u32 2147483647, %v910
    %v1199 = vand.u32 2147483647, %v911
    %v1200 = vand.u32 2147483647, %v912
    %v1201 = vand.u32 2147483647, %v913
    %v1202 = vand.u32 2147483647, %v914
    %v1203 = vand.u32 2147483647, %v915
    %v1204 = vand.u32 2147483647, %v916
    %v1205 = vand.u32 2147483647, %v917
    %v1206 = vand.u32 2147483647, %v918
    %v1207 = vand.u32 2147483647, %v919
    %v1208 = vand.u32 2147483647, %v920
    %v1209 = vand.u32 2147483647, %v921
    %v1210 = vand.u32 2147483647, %v922
    %v1211 = vand.u32 2147483647, %v923
    %v1212 = vand.u32 2147483647, %v924
    %v1213 = vand.u32 2147483647, %v925
    %v1214 = vand.u32 2147483647, %v926
    %v1215 = vand.u32 2147483647, %v927
    %v1216 = vld [vmem:[#allocation7] sm:$0xff]
    %v1217 = vld [vmem:[#allocation7 + $0x8] sm:$0xff]
    %v1218 = vld [vmem:[#allocation7 + $0x10] sm:$0xff]
    %v1219 = vld [vmem:[#allocation7 + $0x18] sm:$0xff]
    %v1220 = vld [vmem:[#allocation7 + $0x20] sm:$0xff]
    %v1221 = vld [vmem:[#allocation7 + $0x28] sm:$0xff]
    %v1222 = vld [vmem:[#allocation7 + $0x30] sm:$0xff]
    %v1223 = vld [vmem:[#allocation7 + $0x38] sm:$0xff]
    %v1224 = vadd.f32 %v928, %v936
    %v1225 = vadd.f32 %v1224, %v944
    %v1226 = vadd.f32 %v1225, %v952
    %v1227 = vadd.f32 %v1226, %v960
    %v1228 = vadd.f32 %v1227, %v968
    %v1229 = vadd.f32 %v1228, %v976
    %v1230 = vadd.f32 %v1229, %v984
    %v1231 = vadd.f32 %v1230, %v992
    %v1232 = vadd.f32 %v1231, %v1000
    %v1233 = vadd.f32 %v1232, %v1008
    %v1234 = vadd.f32 %v1233, %v1016
    %v1235 = vadd.f32 %v1234, %v1024
    %v1236 = vadd.f32 %v1235, %v1032
    %v1237 = vadd.f32 %v1236, %v1040
    %v1238 = vadd.f32 %v1237, %v1048
    %v1239 = vadd.f32 %v1238, %v1056
    %v1240 = vadd.f32 %v1239, %v1064
    %v1241 = vadd.f32 %v1240, %v1072
    %v1242 = vadd.f32 %v1241, %v1080
    %v1243 = vadd.f32 %v1242, %v1088
    %v1244 = vadd.f32 %v1243, %v1096
    %v1245 = vadd.f32 %v1244, %v1104
    %v1246 = vadd.f32 %v1245, %v1112
    %v1247 = vadd.f32 %v1246, %v1120
    %v1248 = vadd.f32 %v1247, %v1128
    %v1249 = vadd.f32 %v1248, %v1136
    %v1250 = vadd.f32 %v1249, %v1144
    %v1251 = vadd.f32 %v1250, %v1152
    %v1252 = vadd.f32 %v1251, %v1160
    %v1253 = vadd.f32 %v1252, %v1168
    %v1254 = vadd.f32 %v1253, %v1176
    %v1255 = vadd.f32 %v1254, %v1184
    %v1256 = vadd.f32 %v1255, %v1192
    %v1257 = vadd.f32 %v1256, %v1200
    %v1258 = vadd.f32 %v1257, %v1208
    %v1259 = vadd.f32 %v929, %v937
    %v1260 = vadd.f32 %v1259, %v945
    %v1261 = vadd.f32 %v1260, %v953
    %v1262 = vadd.f32 %v1261, %v961
    %v1263 = vadd.f32 %v1262, %v969
    %v1264 = vadd.f32 %v1263, %v977
    %v1265 = vadd.f32 %v1264, %v985
    %v1266 = vadd.f32 %v1265, %v993
    %v1267 = vadd.f32 %v1266, %v1001
    %v1268 = vadd.f32 %v1267, %v1009
    %v1269 = vadd.f32 %v1268, %v1017
    %v1270 = vadd.f32 %v1269, %v1025
    %v1271 = vadd.f32 %v1270, %v1033
    %v1272 = vadd.f32 %v1271, %v1041
    %v1273 = vadd.f32 %v1272, %v1049
    %v1274 = vadd.f32 %v1273, %v1057
    %v1275 = vadd.f32 %v1274, %v1065
    %v1276 = vadd.f32 %v1275, %v1073
    %v1277 = vadd.f32 %v1276, %v1081
    %v1278 = vadd.f32 %v1277, %v1089
    %v1279 = vadd.f32 %v1278, %v1097
    %v1280 = vadd.f32 %v1279, %v1105
    %v1281 = vadd.f32 %v1280, %v1113
    %v1282 = vadd.f32 %v1281, %v1121
    %v1283 = vadd.f32 %v1282, %v1129
    %v1284 = vadd.f32 %v1283, %v1137
    %v1285 = vadd.f32 %v1284, %v1145
    %v1286 = vadd.f32 %v1285, %v1153
    %v1287 = vadd.f32 %v1286, %v1161
    %v1288 = vadd.f32 %v1287, %v1169
    %v1289 = vadd.f32 %v1288, %v1177
    %v1290 = vadd.f32 %v1289, %v1185
    %v1291 = vadd.f32 %v1290, %v1193
    %v1292 = vadd.f32 %v1291, %v1201
    %v1293 = vadd.f32 %v1292, %v1209
    %v1294 = vadd.f32 %v930, %v938
    %v1295 = vadd.f32 %v1294, %v946
    %v1296 = vadd.f32 %v1295, %v954
    %v1297 = vadd.f32 %v1296, %v962
    %v1298 = vadd.f32 %v1297, %v970
    %v1299 = vadd.f32 %v1298, %v978
    %v1300 = vadd.f32 %v1299, %v986
    %v1301 = vadd.f32 %v1300, %v994
    %v1302 = vadd.f32 %v1301, %v1002
    %v1303 = vadd.f32 %v1302, %v1010
    %v1304 = vadd.f32 %v1303, %v1018
    %v1305 = vadd.f32 %v1304, %v1026
    %v1306 = vadd.f32 %v1305, %v1034
    %v1307 = vadd.f32 %v1306, %v1042
    %v1308 = vadd.f32 %v1307, %v1050
    %v1309 = vadd.f32 %v1308, %v1058
    %v1310 = vadd.f32 %v1309, %v1066
    %v1311 = vadd.f32 %v1310, %v1074
    %v1312 = vadd.f32 %v1311, %v1082
    %v1313 = vadd.f32 %v1312, %v1090
    %v1314 = vadd.f32 %v1313, %v1098
    %v1315 = vadd.f32 %v1314, %v1106
    %v1316 = vadd.f32 %v1315, %v1114
    %v1317 = vadd.f32 %v1316, %v1122
    %v1318 = vadd.f32 %v1317, %v1130
    %v1319 = vadd.f32 %v1318, %v1138
    %v1320 = vadd.f32 %v1319, %v1146
    %v1321 = vadd.f32 %v1320, %v1154
    %v1322 = vadd.f32 %v1321, %v1162
    %v1323 = vadd.f32 %v1322, %v1170
    %v1324 = vadd.f32 %v1323, %v1178
    %v1325 = vadd.f32 %v1324, %v1186
    %v1326 = vadd.f32 %v1325, %v1194
    %v1327 = vadd.f32 %v1326, %v1202
    %v1328 = vadd.f32 %v1327, %v1210
    %v1329 = vadd.f32 %v931, %v939
    %v1330 = vadd.f32 %v1329, %v947
    %v1331 = vadd.f32 %v1330, %v955
    %v1332 = vadd.f32 %v1331, %v963
    %v1333 = vadd.f32 %v1332, %v971
    %v1334 = vadd.f32 %v1333, %v979
    %v1335 = vadd.f32 %v1334, %v987
    %v1336 = vadd.f32 %v1335, %v995
    %v1337 = vadd.f32 %v1336, %v1003
    %v1338 = vadd.f32 %v1337, %v1011
    %v1339 = vadd.f32 %v1338, %v1019
    %v1340 = vadd.f32 %v1339, %v1027
    %v1341 = vadd.f32 %v1340, %v1035
    %v1342 = vadd.f32 %v1341, %v1043
    %v1343 = vadd.f32 %v1342, %v1051
    %v1344 = vadd.f32 %v1343, %v1059
    %v1345 = vadd.f32 %v1344, %v1067
    %v1346 = vadd.f32 %v1345, %v1075
    %v1347 = vadd.f32 %v1346, %v1083
    %v1348 = vadd.f32 %v1347, %v1091
    %v1349 = vadd.f32 %v1348, %v1099
    %v1350 = vadd.f32 %v1349, %v1107
    %v1351 = vadd.f32 %v1350, %v1115
    %v1352 = vadd.f32 %v1351, %v1123
    %v1353 = vadd.f32 %v1352, %v1131
    %v1354 = vadd.f32 %v1353, %v1139
    %v1355 = vadd.f32 %v1354, %v1147
    %v1356 = vadd.f32 %v1355, %v1155
    %v1357 = vadd.f32 %v1356, %v1163
    %v1358 = vadd.f32 %v1357, %v1171
    %v1359 = vadd.f32 %v1358, %v1179
    %v1360 = vadd.f32 %v1359, %v1187
    %v1361 = vadd.f32 %v1360, %v1195
    %v1362 = vadd.f32 %v1361, %v1203
    %v1363 = vadd.f32 %v1362, %v1211
    %v1364 = vadd.f32 %v932, %v940
    %v1365 = vadd.f32 %v1364, %v948
    %v1366 = vadd.f32 %v1365, %v956
    %v1367 = vadd.f32 %v1366, %v964
    %v1368 = vadd.f32 %v1367, %v972
    %v1369 = vadd.f32 %v1368, %v980
    %v1370 = vadd.f32 %v1369, %v988
    %v1371 = vadd.f32 %v1370, %v996
    %v1372 = vadd.f32 %v1371, %v1004
    %v1373 = vadd.f32 %v1372, %v1012
    %v1374 = vadd.f32 %v1373, %v1020
    %v1375 = vadd.f32 %v1374, %v1028
    %v1376 = vadd.f32 %v1375, %v1036
    %v1377 = vadd.f32 %v1376, %v1044
    %v1378 = vadd.f32 %v1377, %v1052
    %v1379 = vadd.f32 %v1378, %v1060
    %v1380 = vadd.f32 %v1379, %v1068
    %v1381 = vadd.f32 %v1380, %v1076
    %v1382 = vadd.f32 %v1381, %v1084
    %v1383 = vadd.f32 %v1382, %v1092
    %v1384 = vadd.f32 %v1383, %v1100
    %v1385 = vadd.f32 %v1384, %v1108
    %v1386 = vadd.f32 %v1385, %v1116
    %v1387 = vadd.f32 %v1386, %v1124
    %v1388 = vadd.f32 %v1387, %v1132
    %v1389 = vadd.f32 %v1388, %v1140
    %v1390 = vadd.f32 %v1389, %v1148
    %v1391 = vadd.f32 %v1390, %v1156
    %v1392 = vadd.f32 %v1391, %v1164
    %v1393 = vadd.f32 %v1392, %v1172
    %v1394 = vadd.f32 %v1393, %v1180
    %v1395 = vadd.f32 %v1394, %v1188
    %v1396 = vadd.f32 %v1395, %v1196
    %v1397 = vadd.f32 %v1396, %v1204
    %v1398 = vadd.f32 %v1397, %v1212
    %v1399 = vadd.f32 %v933, %v941
    %v1400 = vadd.f32 %v1399, %v949
    %v1401 = vadd.f32 %v1400, %v957
    %v1402 = vadd.f32 %v1401, %v965
    %v1403 = vadd.f32 %v1402, %v973
    %v1404 = vadd.f32 %v1403, %v981
    %v1405 = vadd.f32 %v1404, %v989
    %v1406 = vadd.f32 %v1405, %v997
    %v1407 = vadd.f32 %v1406, %v1005
    %v1408 = vadd.f32 %v1407, %v1013
    %v1409 = vadd.f32 %v1408, %v1021
    %v1410 = vadd.f32 %v1409, %v1029
    %v1411 = vadd.f32 %v1410, %v1037
    %v1412 = vadd.f32 %v1411, %v1045
    %v1413 = vadd.f32 %v1412, %v1053
    %v1414 = vadd.f32 %v1413, %v1061
    %v1415 = vadd.f32 %v1414, %v1069
    %v1416 = vadd.f32 %v1415, %v1077
    %v1417 = vadd.f32 %v1416, %v1085
    %v1418 = vadd.f32 %v1417, %v1093
    %v1419 = vadd.f32 %v1418, %v1101
    %v1420 = vadd.f32 %v1419, %v1109
    %v1421 = vadd.f32 %v1420, %v1117
    %v1422 = vadd.f32 %v1421, %v1125
    %v1423 = vadd.f32 %v1422, %v1133
    %v1424 = vadd.f32 %v1423, %v1141
    %v1425 = vadd.f32 %v1424, %v1149
    %v1426 = vadd.f32 %v1425, %v1157
    %v1427 = vadd.f32 %v1426, %v1165
    %v1428 = vadd.f32 %v1427, %v1173
    %v1429 = vadd.f32 %v1428, %v1181
    %v1430 = vadd.f32 %v1429, %v1189
    %v1431 = vadd.f32 %v1430, %v1197
    %v1432 = vadd.f32 %v1431, %v1205
    %v1433 = vadd.f32 %v1432, %v1213
    %v1434 = vadd.f32 %v934, %v942
    %v1435 = vadd.f32 %v1434, %v950
    %v1436 = vadd.f32 %v1435, %v958
    %v1437 = vadd.f32 %v1436, %v966
    %v1438 = vadd.f32 %v1437, %v974
    %v1439 = vadd.f32 %v1438, %v982
    %v1440 = vadd.f32 %v1439, %v990
    %v1441 = vadd.f32 %v1440, %v998
    %v1442 = vadd.f32 %v1441, %v1006
    %v1443 = vadd.f32 %v1442, %v1014
    %v1444 = vadd.f32 %v1443, %v1022
    %v1445 = vadd.f32 %v1444, %v1030
    %v1446 = vadd.f32 %v1445, %v1038
    %v1447 = vadd.f32 %v1446, %v1046
    %v1448 = vadd.f32 %v1447, %v1054
    %v1449 = vadd.f32 %v1448, %v1062
    %v1450 = vadd.f32 %v1449, %v1070
    %v1451 = vadd.f32 %v1450, %v1078
    %v1452 = vadd.f32 %v1451, %v1086
    %v1453 = vadd.f32 %v1452, %v1094
    %v1454 = vadd.f32 %v1453, %v1102
    %v1455 = vadd.f32 %v1454, %v1110
    %v1456 = vadd.f32 %v1455, %v1118
    %v1457 = vadd.f32 %v1456, %v1126
    %v1458 = vadd.f32 %v1457, %v1134
    %v1459 = vadd.f32 %v1458, %v1142
    %v1460 = vadd.f32 %v1459, %v1150
    %v1461 = vadd.f32 %v1460, %v1158
    %v1462 = vadd.f32 %v1461, %v1166
    %v1463 = vadd.f32 %v1462, %v1174
    %v1464 = vadd.f32 %v1463, %v1182
    %v1465 = vadd.f32 %v1464, %v1190
    %v1466 = vadd.f32 %v1465, %v1198
    %v1467 = vadd.f32 %v1466, %v1206
    %v1468 = vadd.f32 %v1467, %v1214
    %v1469 = vadd.f32 %v935, %v943
    %v1470 = vadd.f32 %v1469, %v951
    %v1471 = vadd.f32 %v1470, %v959
    %v1472 = vadd.f32 %v1471, %v967
    %v1473 = vadd.f32 %v1472, %v975
    %v1474 = vadd.f32 %v1473, %v983
    %v1475 = vadd.f32 %v1474, %v991
    %v1476 = vadd.f32 %v1475, %v999
    %v1477 = vadd.f32 %v1476, %v1007
    %v1478 = vadd.f32 %v1477, %v1015
    %v1479 = vadd.f32 %v1478, %v1023
    %v1480 = vadd.f32 %v1479, %v1031
    %v1481 = vadd.f32 %v1480, %v1039
    %v1482 = vadd.f32 %v1481, %v1047
    %v1483 = vadd.f32 %v1482, %v1055
    %v1484 = vadd.f32 %v1483, %v1063
    %v1485 = vadd.f32 %v1484, %v1071
    %v1486 = vadd.f32 %v1485, %v1079
    %v1487 = vadd.f32 %v1486, %v1087
    %v1488 = vadd.f32 %v1487, %v1095
    %v1489 = vadd.f32 %v1488, %v1103
    %v1490 = vadd.f32 %v1489, %v1111
    %v1491 = vadd.f32 %v1490, %v1119
    %v1492 = vadd.f32 %v1491, %v1127
    %v1493 = vadd.f32 %v1492, %v1135
    %v1494 = vadd.f32 %v1493, %v1143
    %v1495 = vadd.f32 %v1494, %v1151
    %v1496 = vadd.f32 %v1495, %v1159
    %v1497 = vadd.f32 %v1496, %v1167
    %v1498 = vadd.f32 %v1497, %v1175
    %v1499 = vadd.f32 %v1498, %v1183
    %v1500 = vadd.f32 %v1499, %v1191
    %v1501 = vadd.f32 %v1500, %v1199
    %v1502 = vadd.f32 %v1501, %v1207
    %v1503 = vadd.f32 %v1502, %v1215
    %v1504 = vadd.f32 %v1216, %v1258
    %v1505 = vadd.f32 %v1217, %v1293
    %v1506 = vadd.f32 %v1218, %v1328
    %v1507 = vadd.f32 %v1219, %v1363
    %v1508 = vadd.f32 %v1220, %v1398
    %v1509 = vadd.f32 %v1221, %v1433
    %v1510 = vadd.f32 %v1222, %v1468
    %v1511 = vadd.f32 %v1223, %v1503
    %1512 = vst [vmem:[#allocation7] sm:$0xff] %v1504
    %1513 = vst [vmem:[#allocation7 + $0x8] sm:$0xff] %v1505
    %1514 = vst [vmem:[#allocation7 + $0x10] sm:$0xff] %v1506
    %1515 = vst [vmem:[#allocation7 + $0x18] sm:$0xff] %v1507
    %1516 = vst [vmem:[#allocation7 + $0x20] sm:$0xff] %v1508
    %1517 = vst [vmem:[#allocation7 + $0x28] sm:$0xff] %v1509
    %1518 = vst [vmem:[#allocation7 + $0x30] sm:$0xff] %v1510
    %1519 = vst [vmem:[#allocation7 + $0x38] sm:$0xff] %v1511
    // Predicated region
    $region22: #{tpu_custom_call.1} parent=1 // pred_check
      _
    $region23: #{tpu_custom_call.1} parent=1 // pred_check_branch
      %1521 = sbr.rel (0) target = $region25
    $region24: #{tpu_custom_call.1} parent=1 // pred_region
      %s1523 = ssub.s32 1024, 1024
      %1524 = vsyncadd [#allocation4], %s1523
      %s1525 = sshll.u32 [#allocation7], 4
      %s1526 = int_to_ptr.vmem [resolvable:$true] %s1525
      %1531 = dma.vmem_to_hbm [thread:$0]  %s1526, 1024, %s2, [#allocation4], 128, 128, 8
    $region25: #{tpu_custom_call.1} parent=1 // pred_fallthru
      _
    // Predicated region
    $region26: #{tpu_custom_call.1} parent=1 // pred_check
      _
    $region27: #{tpu_custom_call.1} parent=1 // pred_check_branch
      %1533 = sbr.rel (0) target = $region29
    $region28: #{tpu_custom_call.1} parent=1 // pred_region
      %1534 = dma.done [#allocation4], 1024
    $region29: #{tpu_custom_call.1} parent=1 // pred_fallthru
      _
    %1535 = vsyncpa [#allocation3], 1
    %1536 = vsyncpa [#allocation6], 1
    %1537 = vsyncpa [#allocation4], 1

</llo_original>
